<compile_context>
chip_gen: v7x
topology: tpu7x:2x2x1
jax: 0.10.0
libtpu: 0.0.40
codegen_flags: <defaults>
</compile_context>

<pallas_src>
import functools

import jax
import jax.numpy as jnp
from jax import lax
from jax.experimental import pallas as pl
from jax.experimental.pallas import tpu as pltpu


def _layer_norm(x, gamma, beta, eps=1e-5):
    mu = jnp.mean(x, axis=-1, keepdims=True)
    var = jnp.mean((x - mu) ** 2, axis=-1, keepdims=True)
    return (x - mu) * lax.rsqrt(var + eps) * gamma + beta


def encoder_layer_kernel(nhead,
                         x_ref,
                         wqkv_ref, bqkv_ref, wo_ref, bo_ref,
                         g1_ref, be1_ref,
                         w1_ref, b1_ref, w2_ref, b2_ref,
                         g2_ref, be2_ref,
                         o_ref,
                         act_ref, ctx_ref):
    layer = pl.program_id(1)

    # Load this batch sample's activation once; it then stays resident in VMEM
    # scratch across the whole layer stack (layer axis is the inner grid dim).
    @pl.when(layer == 0)
    def _():
        act_ref[...] = x_ref[...].astype(jnp.float32)

    x = act_ref[...]                                   # (S, D) f32
    seq, d_model = x.shape
    dh = d_model // nhead
    scale = 1.0 / float(dh) ** 0.5

    # --- fused QKV projection: one full-depth MXU matmul ----------------------
    x_bf = x.astype(jnp.bfloat16)
    qkv = jnp.dot(x_bf, wqkv_ref[...],
                  preferred_element_type=jnp.float32) + bqkv_ref[...]   # (S,3D)

    # --- multi-head self attention (per batch sample -> no mask) --------------
    dims_nt = (((1,), (1,)), ((), ()))        # contract last dims (K row-major)
    for h in range(nhead):                    # static; temps are only (S, S)
        lo = h * dh
        qh = qkv[:, lo:lo + dh].astype(jnp.bfloat16)
        kh = qkv[:, d_model + lo:d_model + lo + dh].astype(jnp.bfloat16)
        vh = qkv[:, 2 * d_model + lo:2 * d_model + lo + dh].astype(jnp.bfloat16)

        s = lax.dot_general(qh, kh, dims_nt,
                            preferred_element_type=jnp.float32) * scale  # (S,S)
        s = s - jnp.max(s, axis=-1, keepdims=True)
        p = jnp.exp(s)
        p = p * pl.reciprocal(jnp.sum(p, axis=-1, keepdims=True))        # exact
        ctx_ref[:, lo:lo + dh] = jnp.dot(p.astype(jnp.bfloat16), vh,
                                         preferred_element_type=jnp.float32)

    # Single full-width output projection over all heads.
    attn = jnp.dot(ctx_ref[...].astype(jnp.bfloat16), wo_ref[...],
                   preferred_element_type=jnp.float32) + bo_ref[...]

    # dropout == identity at inference
    y = _layer_norm(x + attn, g1_ref[...], be1_ref[...])

    # --- position-wise feed-forward --------------------------------------------
    h1 = jnp.dot(y.astype(jnp.bfloat16), w1_ref[...],
                 preferred_element_type=jnp.float32) + b1_ref[...]
    h1 = jnp.maximum(h1, 0.0)
    h2 = jnp.dot(h1.astype(jnp.bfloat16), w2_ref[...],
                 preferred_element_type=jnp.float32) + b2_ref[...]

    out = _layer_norm(y + h2, g2_ref[...], be2_ref[...])

    act_ref[...] = out                       # stays resident for layer + 1
    o_ref[...] = out.astype(o_ref.dtype)     # flushed to HBM when batch changes


_PARAM_ORDER = ("wqkv", "bqkv", "wo", "bo",
                "g1", "be1", "w1", "b1", "w2", "b2", "g2", "be2")


def _prepare_layer(params):
    """Fuse Q/K/V weights & biases, cast matmul weights to bf16 (trace time)."""
    bf16 = jnp.bfloat16
    f32 = jnp.float32
    return dict(
        wqkv=jnp.concatenate([params["wq"], params["wk"], params["wv"]],
                             axis=1).astype(bf16),                 # (D, 3D)
        bqkv=jnp.concatenate([params["bq"], params["bk"], params["bv"]],
                             axis=1).astype(f32),                  # (1, 3D)
        wo=params["wo"].astype(bf16),                              # (D, D)
        bo=params["bo"].astype(f32),
        g1=params["g1"].astype(f32), be1=params["be1"].astype(f32),
        w1=params["w1"].astype(bf16),                              # (D, Dh)
        b1=params["b1"].astype(f32),
        w2=params["w2"].astype(bf16),                              # (Dh, D)
        b2=params["b2"].astype(f32),
        g2=params["g2"].astype(f32), be2=params["be2"].astype(f32),
    )


def encoder_block(x, layer_params_list, nhead):
    """EncoderBlock.forward: n_layers encoder layers fused in one pallas_call."""
    B, S, D = x.shape
    assert D % nhead == 0
    n_layers = len(layer_params_list)

    prepared = [_prepare_layer(p) for p in layer_params_list]
    # Stack every parameter along a leading n_layers axis -> (L, r, c) each.
    stacked = [jnp.stack([p[k] for p in prepared], axis=0) for k in _PARAM_ORDER]

    x_spec = pl.BlockSpec((None, S, D), lambda b, l: (b, 0, 0))
    w_spec = lambda w: pl.BlockSpec((None,) + w.shape[1:],
                                    lambda b, l: (l, 0, 0))
    in_specs = [x_spec] + [w_spec(w) for w in stacked]

    out = pl.pallas_call(
        functools.partial(encoder_layer_kernel, nhead),
        out_shape=jax.ShapeDtypeStruct((B, S, D), x.dtype),
        grid=(B, n_layers),
        in_specs=in_specs,
        out_specs=pl.BlockSpec((None, S, D), lambda b, l: (b, 0, 0)),
        scratch_shapes=[pltpu.VMEM((S, D), jnp.float32),   # resident activation
                        pltpu.VMEM((S, D), jnp.float32)],  # per-head ctx slab
        compiler_params=pltpu.CompilerParams(
            dimension_semantics=("parallel", "arbitrary"),
            vmem_limit_bytes=56 * 1024 * 1024),
    )(x, *stacked)
    return out


def init_layer_params(key, d_model, d_hidden):
    ks = jax.random.split(key, 8)
    sc = 0.05
    f32 = jnp.float32
    return dict(
        wq=jax.random.normal(ks[0], (d_model, d_model), f32) * sc,
        bq=jax.random.normal(ks[1], (1, d_model), f32) * sc,
        wk=jax.random.normal(ks[2], (d_model, d_model), f32) * sc,
        bk=jnp.zeros((1, d_model), f32),
        wv=jax.random.normal(ks[3], (d_model, d_model), f32) * sc,
        bv=jnp.zeros((1, d_model), f32),
        wo=jax.random.normal(ks[4], (d_model, d_model), f32) * sc,
        bo=jnp.zeros((1, d_model), f32),
        g1=jnp.ones((1, d_model), f32),
        be1=jnp.zeros((1, d_model), f32),
        w1=jax.random.normal(ks[5], (d_model, d_hidden), f32) * sc,
        b1=jax.random.normal(ks[6], (1, d_hidden), f32) * sc,
        w2=jax.random.normal(ks[7], (d_hidden, d_model), f32) * sc,
        b2=jnp.zeros((1, d_model), f32),
        g2=jnp.ones((1, d_model), f32),
        be2=jnp.zeros((1, d_model), f32),
    )


def _reference_encoder_block(x, layer_params_list, nhead):
    """Pure-JAX f32 reference (matches the PyTorch post-LN encoder layer)."""
    B, S, D = x.shape
    dh = D // nhead
    scale = 1.0 / float(dh) ** 0.5

    def ln(v, g, b, eps=1e-5):
        mu = v.mean(-1, keepdims=True)
        var = ((v - mu) ** 2).mean(-1, keepdims=True)
        return (v - mu) / jnp.sqrt(var + eps) * g + b

    for p in layer_params_list:
        q = x @ p["wq"] + p["bq"]
        k = x @ p["wk"] + p["bk"]
        v = x @ p["wv"] + p["bv"]
        q = q.reshape(B, S, nhead, dh).transpose(0, 2, 1, 3)
        k = k.reshape(B, S, nhead, dh).transpose(0, 2, 1, 3)
        v = v.reshape(B, S, nhead, dh).transpose(0, 2, 1, 3)
        s = jnp.einsum("bhqd,bhkd->bhqk", q, k) * scale
        pmat = jax.nn.softmax(s, axis=-1)
        ctx = jnp.einsum("bhqk,bhkd->bhqd", pmat, v)
        ctx = ctx.transpose(0, 2, 1, 3).reshape(B, S, D)
        attn = ctx @ p["wo"] + p["bo"]
        y = ln(x + attn, p["g1"], p["be1"])
        h1 = jnp.maximum(y @ p["w1"] + p["b1"], 0.0)
        h2 = h1 @ p["w2"] + p["b2"]
        x = ln(y + h2, p["g2"], p["be2"])
    return x


if __name__ == "__main__":
    # Hyper-parameters implied by EncoderBlock(d_model, nhead, d_hidden, n_layers, dropout)
    d_model, nhead, d_hidden, n_layers, dropout = 32, 4, 64, 2, 0.0
    B, S = 2, 8

    root = jax.random.PRNGKey(0)
    k_x, k_p = jax.random.split(root)
    x = jax.random.normal(k_x, (B, S, d_model), jnp.float32)

    layer_keys = jax.random.split(k_p, n_layers)
    layer_params = [init_layer_params(k, d_model, d_hidden) for k in layer_keys]

    out = encoder_block(x, layer_params, nhead)
    out = jax.block_until_ready(out)

    assert out.shape == (B, S, d_model) and out.dtype == jnp.float32
    assert bool(jnp.all(jnp.isfinite(out)))
    ref = _reference_encoder_block(x, layer_params, nhead)
    # bf16 matmul operands (f32 accumulation / LN / softmax) vs pure-f32 ref.
    assert bool(jnp.allclose(out, ref, atol=2e-2, rtol=2e-2))
    print("KERNEL_OK")
</pallas_src>

<mosaic_0001>
module attributes {stable_mosaic.version = 11 : i64} {
  func.func @encoder_layer_kernel(%arg0: i32, %arg1: i32, %arg2: memref<1x8x32xf32, #tpu.memory_space<vmem>>, %arg3: memref<1x32x96xbf16, #tpu.memory_space<vmem>>, %arg4: memref<1x1x96xf32, #tpu.memory_space<vmem>>, %arg5: memref<1x32x32xbf16, #tpu.memory_space<vmem>>, %arg6: memref<1x1x32xf32, #tpu.memory_space<vmem>>, %arg7: memref<1x1x32xf32, #tpu.memory_space<vmem>>, %arg8: memref<1x1x32xf32, #tpu.memory_space<vmem>>, %arg9: memref<1x32x64xbf16, #tpu.memory_space<vmem>>, %arg10: memref<1x1x64xf32, #tpu.memory_space<vmem>>, %arg11: memref<1x64x32xbf16, #tpu.memory_space<vmem>>, %arg12: memref<1x1x32xf32, #tpu.memory_space<vmem>>, %arg13: memref<1x1x32xf32, #tpu.memory_space<vmem>>, %arg14: memref<1x1x32xf32, #tpu.memory_space<vmem>>, %arg15: memref<1x8x32xf32, #tpu.memory_space<vmem>>, %arg16: memref<8x32xf32, #tpu.memory_space<vmem>>, %arg17: memref<8x32xf32, #tpu.memory_space<vmem>>) attributes {dimension_semantics = [#tpu.dimension_semantics<parallel>, #tpu.dimension_semantics<arbitrary>], iteration_bounds = array<i64: 2, 2>, scalar_prefetch = 0 : i64, scratch_operands = 2 : i64, tpu.core_type = #tpu.core_type<tc>, window_params = [{transform_indices = @transform_0, window_bounds = array<i64: 1, 8, 32>}, {transform_indices = @transform_1, window_bounds = array<i64: 1, 32, 96>}, {transform_indices = @transform_2, window_bounds = array<i64: 1, 1, 96>}, {transform_indices = @transform_3, window_bounds = array<i64: 1, 32, 32>}, {transform_indices = @transform_4, window_bounds = array<i64: 1, 1, 32>}, {transform_indices = @transform_5, window_bounds = array<i64: 1, 1, 32>}, {transform_indices = @transform_6, window_bounds = array<i64: 1, 1, 32>}, {transform_indices = @transform_7, window_bounds = array<i64: 1, 32, 64>}, {transform_indices = @transform_8, window_bounds = array<i64: 1, 1, 64>}, {transform_indices = @transform_9, window_bounds = array<i64: 1, 64, 32>}, {transform_indices = @transform_10, window_bounds = array<i64: 1, 1, 32>}, {transform_indices = @transform_11, window_bounds = array<i64: 1, 1, 32>}, {transform_indices = @transform_12, window_bounds = array<i64: 1, 1, 32>}, {transform_indices = @transform_13, window_bounds = array<i64: 1, 8, 32>}]} {
    %c0_i32 = arith.constant 0 : i32
    %0 = arith.cmpi eq, %arg1, %c0_i32 : i32
    %1 = arith.extui %0 : i1 to i32
    %c0_i32_0 = arith.constant 0 : i32
    %2 = arith.cmpi ne, %1, %c0_i32_0 : i32
    scf.if %2 {
      %c0_84 = arith.constant 0 : index
      %c0_85 = arith.constant 0 : index
      %c0_86 = arith.constant 0 : index
      %185 = vector.load %arg2[%c0_84, %c0_85, %c0_86] : memref<1x8x32xf32, #tpu.memory_space<vmem>>, vector<1x8x32xf32>
      %186 = vector.shape_cast %185 : vector<1x8x32xf32> to vector<8x32xf32>
      %c0_87 = arith.constant 0 : index
      %c0_88 = arith.constant 0 : index
      %187 = vector.load %arg16[%c0_87, %c0_88] : memref<8x32xf32, #tpu.memory_space<vmem>>, vector<8x32xf32>
      tpu.vector_store %arg16[%c0_87, %c0_88], %186 {strides = array<i32>} : memref<8x32xf32, #tpu.memory_space<vmem>>, vector<8x32xf32>,
    } else {
    }
    %c0 = arith.constant 0 : index
    %c0_1 = arith.constant 0 : index
    %3 = vector.load %arg16[%c0, %c0_1] : memref<8x32xf32, #tpu.memory_space<vmem>>, vector<8x32xf32>
    %4 = arith.truncf %3 : vector<8x32xf32> to vector<8x32xbf16>
    %c0_2 = arith.constant 0 : index
    %c0_3 = arith.constant 0 : index
    %c0_4 = arith.constant 0 : index
    %5 = vector.load %arg3[%c0_2, %c0_3, %c0_4] : memref<1x32x96xbf16, #tpu.memory_space<vmem>>, vector<1x32x96xbf16>
    %6 = vector.shape_cast %5 : vector<1x32x96xbf16> to vector<32x96xbf16>
    %cst = arith.constant dense<0.000000e+00> : vector<8x96xf32>
    %7 = tpu.matmul %4, %6, %cst {dimension_numbers = #tpu.dot_dimension_numbers<[1], [0], [0], [1], [0, 0, 1, 1], [], []>} : vector<8x32xbf16>, vector<32x96xbf16>, vector<8x96xf32> -> vector<8x96xf32>
    %c0_5 = arith.constant 0 : index
    %c0_6 = arith.constant 0 : index
    %c0_7 = arith.constant 0 : index
    %8 = vector.load %arg4[%c0_5, %c0_6, %c0_7] : memref<1x1x96xf32, #tpu.memory_space<vmem>>, vector<1x1x96xf32>
    %9 = vector.shape_cast %8 : vector<1x1x96xf32> to vector<1x96xf32>
    %10 = vector.broadcast %9 : vector<1x96xf32> to vector<8x96xf32>
    %11 = arith.addf %7, %10 : vector<8x96xf32>
    %12 = vector.extract_strided_slice %11 {offsets = [0, 0], sizes = [8, 8], strides = [1, 1]} : vector<8x96xf32> to vector<8x8xf32>
    %13 = arith.truncf %12 : vector<8x8xf32> to vector<8x8xbf16>
    %14 = vector.extract_strided_slice %11 {offsets = [0, 32], sizes = [8, 8], strides = [1, 1]} : vector<8x96xf32> to vector<8x8xf32>
    %15 = arith.truncf %14 : vector<8x8xf32> to vector<8x8xbf16>
    %16 = vector.extract_strided_slice %11 {offsets = [0, 64], sizes = [8, 8], strides = [1, 1]} : vector<8x96xf32> to vector<8x8xf32>
    %17 = arith.truncf %16 : vector<8x8xf32> to vector<8x8xbf16>
    %cst_8 = arith.constant dense<0.000000e+00> : vector<8x8xf32>
    %18 = tpu.matmul %13, %15, %cst_8 {dimension_numbers = #tpu.dot_dimension_numbers<[1], [1], [0], [0], [0, 0, 1, 0], [], []>} : vector<8x8xbf16>, vector<8x8xbf16>, vector<8x8xf32> -> vector<8x8xf32>
    %cst_9 = arith.constant 0.353553385 : f32
    %19 = vector.broadcast %cst_9 : f32 to vector<8x8xf32>
    %20 = arith.mulf %18, %19 : vector<8x8xf32>
    %cst_10 = arith.constant dense<0xFF800000> : vector<8xf32>
    %21 = vector.multi_reduction <maximumf>, %20, %cst_10 [1] : vector<8x8xf32> to vector<8xf32>
    %22 = vector.shape_cast %21 : vector<8xf32> to vector<8x1xf32>
    %23 = vector.broadcast %22 : vector<8x1xf32> to vector<8x8xf32>
    %24 = arith.subf %20, %23 : vector<8x8xf32>
    %25 = math.exp %24 : vector<8x8xf32>
    %cst_11 = arith.constant dense<0.000000e+00> : vector<8xf32>
    %26 = vector.multi_reduction <add>, %25, %cst_11 [1] : vector<8x8xf32> to vector<8xf32>
    %27 = vector.shape_cast %26 : vector<8xf32> to vector<8x1xf32>
    %28 = tpu.reciprocal %27 : vector<8x1xf32> -> vector<8x1xf32>
    %29 = vector.broadcast %28 : vector<8x1xf32> to vector<8x8xf32>
    %30 = arith.mulf %25, %29 : vector<8x8xf32>
    %31 = arith.truncf %30 : vector<8x8xf32> to vector<8x8xbf16>
    %cst_12 = arith.constant dense<0.000000e+00> : vector<8x8xf32>
    %32 = tpu.matmul %31, %17, %cst_12 {dimension_numbers = #tpu.dot_dimension_numbers<[1], [0], [0], [1], [0, 0, 1, 1], [], []>} : vector<8x8xbf16>, vector<8x8xbf16>, vector<8x8xf32> -> vector<8x8xf32>
    %c0_13 = arith.constant 0 : index
    %c0_14 = arith.constant 0 : index
    %33 = vector.load %arg17[%c0_13, %c0_14] : memref<8x32xf32, #tpu.memory_space<vmem>>, vector<8x8xf32>
    tpu.vector_store %arg17[%c0_13, %c0_14], %32 {strides = array<i32>} : memref<8x32xf32, #tpu.memory_space<vmem>>, vector<8x8xf32>,
    %34 = vector.extract_strided_slice %11 {offsets = [0, 8], sizes = [8, 8], strides = [1, 1]} : vector<8x96xf32> to vector<8x8xf32>
    %35 = arith.truncf %34 : vector<8x8xf32> to vector<8x8xbf16>
    %36 = vector.extract_strided_slice %11 {offsets = [0, 40], sizes = [8, 8], strides = [1, 1]} : vector<8x96xf32> to vector<8x8xf32>
    %37 = arith.truncf %36 : vector<8x8xf32> to vector<8x8xbf16>
    %38 = vector.extract_strided_slice %11 {offsets = [0, 72], sizes = [8, 8], strides = [1, 1]} : vector<8x96xf32> to vector<8x8xf32>
    %39 = arith.truncf %38 : vector<8x8xf32> to vector<8x8xbf16>
    %cst_15 = arith.constant dense<0.000000e+00> : vector<8x8xf32>
    %40 = tpu.matmul %35, %37, %cst_15 {dimension_numbers = #tpu.dot_dimension_numbers<[1], [1], [0], [0], [0, 0, 1, 0], [], []>} : vector<8x8xbf16>, vector<8x8xbf16>, vector<8x8xf32> -> vector<8x8xf32>
    %cst_16 = arith.constant 0.353553385 : f32
    %41 = vector.broadcast %cst_16 : f32 to vector<8x8xf32>
    %42 = arith.mulf %40, %41 : vector<8x8xf32>
    %cst_17 = arith.constant dense<0xFF800000> : vector<8xf32>
    %43 = vector.multi_reduction <maximumf>, %42, %cst_17 [1] : vector<8x8xf32> to vector<8xf32>
    %44 = vector.shape_cast %43 : vector<8xf32> to vector<8x1xf32>
    %45 = vector.broadcast %44 : vector<8x1xf32> to vector<8x8xf32>
    %46 = arith.subf %42, %45 : vector<8x8xf32>
    %47 = math.exp %46 : vector<8x8xf32>
    %cst_18 = arith.constant dense<0.000000e+00> : vector<8xf32>
    %48 = vector.multi_reduction <add>, %47, %cst_18 [1] : vector<8x8xf32> to vector<8xf32>
    %49 = vector.shape_cast %48 : vector<8xf32> to vector<8x1xf32>
    %50 = tpu.reciprocal %49 : vector<8x1xf32> -> vector<8x1xf32>
    %51 = vector.broadcast %50 : vector<8x1xf32> to vector<8x8xf32>
    %52 = arith.mulf %47, %51 : vector<8x8xf32>
    %53 = arith.truncf %52 : vector<8x8xf32> to vector<8x8xbf16>
    %cst_19 = arith.constant dense<0.000000e+00> : vector<8x8xf32>
    %54 = tpu.matmul %53, %39, %cst_19 {dimension_numbers = #tpu.dot_dimension_numbers<[1], [0], [0], [1], [0, 0, 1, 1], [], []>} : vector<8x8xbf16>, vector<8x8xbf16>, vector<8x8xf32> -> vector<8x8xf32>
    %c0_20 = arith.constant 0 : index
    %c8 = arith.constant 8 : index
    %55 = vector.load %arg17[%c0_20, %c8] : memref<8x32xf32, #tpu.memory_space<vmem>>, vector<8x8xf32>
    tpu.vector_store %arg17[%c0_20, %c8], %54 {strides = array<i32>} : memref<8x32xf32, #tpu.memory_space<vmem>>, vector<8x8xf32>,
    %56 = vector.extract_strided_slice %11 {offsets = [0, 16], sizes = [8, 8], strides = [1, 1]} : vector<8x96xf32> to vector<8x8xf32>
    %57 = arith.truncf %56 : vector<8x8xf32> to vector<8x8xbf16>
    %58 = vector.extract_strided_slice %11 {offsets = [0, 48], sizes = [8, 8], strides = [1, 1]} : vector<8x96xf32> to vector<8x8xf32>
    %59 = arith.truncf %58 : vector<8x8xf32> to vector<8x8xbf16>
    %60 = vector.extract_strided_slice %11 {offsets = [0, 80], sizes = [8, 8], strides = [1, 1]} : vector<8x96xf32> to vector<8x8xf32>
    %61 = arith.truncf %60 : vector<8x8xf32> to vector<8x8xbf16>
    %cst_21 = arith.constant dense<0.000000e+00> : vector<8x8xf32>
    %62 = tpu.matmul %57, %59, %cst_21 {dimension_numbers = #tpu.dot_dimension_numbers<[1], [1], [0], [0], [0, 0, 1, 0], [], []>} : vector<8x8xbf16>, vector<8x8xbf16>, vector<8x8xf32> -> vector<8x8xf32>
    %cst_22 = arith.constant 0.353553385 : f32
    %63 = vector.broadcast %cst_22 : f32 to vector<8x8xf32>
    %64 = arith.mulf %62, %63 : vector<8x8xf32>
    %cst_23 = arith.constant dense<0xFF800000> : vector<8xf32>
    %65 = vector.multi_reduction <maximumf>, %64, %cst_23 [1] : vector<8x8xf32> to vector<8xf32>
    %66 = vector.shape_cast %65 : vector<8xf32> to vector<8x1xf32>
    %67 = vector.broadcast %66 : vector<8x1xf32> to vector<8x8xf32>
    %68 = arith.subf %64, %67 : vector<8x8xf32>
    %69 = math.exp %68 : vector<8x8xf32>
    %cst_24 = arith.constant dense<0.000000e+00> : vector<8xf32>
    %70 = vector.multi_reduction <add>, %69, %cst_24 [1] : vector<8x8xf32> to vector<8xf32>
    %71 = vector.shape_cast %70 : vector<8xf32> to vector<8x1xf32>
    %72 = tpu.reciprocal %71 : vector<8x1xf32> -> vector<8x1xf32>
    %73 = vector.broadcast %72 : vector<8x1xf32> to vector<8x8xf32>
    %74 = arith.mulf %69, %73 : vector<8x8xf32>
    %75 = arith.truncf %74 : vector<8x8xf32> to vector<8x8xbf16>
    %cst_25 = arith.constant dense<0.000000e+00> : vector<8x8xf32>
    %76 = tpu.matmul %75, %61, %cst_25 {dimension_numbers = #tpu.dot_dimension_numbers<[1], [0], [0], [1], [0, 0, 1, 1], [], []>} : vector<8x8xbf16>, vector<8x8xbf16>, vector<8x8xf32> -> vector<8x8xf32>
    %c0_26 = arith.constant 0 : index
    %c16 = arith.constant 16 : index
    %77 = vector.load %arg17[%c0_26, %c16] : memref<8x32xf32, #tpu.memory_space<vmem>>, vector<8x8xf32>
    tpu.vector_store %arg17[%c0_26, %c16], %76 {strides = array<i32>} : memref<8x32xf32, #tpu.memory_space<vmem>>, vector<8x8xf32>,
    %78 = vector.extract_strided_slice %11 {offsets = [0, 24], sizes = [8, 8], strides = [1, 1]} : vector<8x96xf32> to vector<8x8xf32>
    %79 = arith.truncf %78 : vector<8x8xf32> to vector<8x8xbf16>
    %80 = vector.extract_strided_slice %11 {offsets = [0, 56], sizes = [8, 8], strides = [1, 1]} : vector<8x96xf32> to vector<8x8xf32>
    %81 = arith.truncf %80 : vector<8x8xf32> to vector<8x8xbf16>
    %82 = vector.extract_strided_slice %11 {offsets = [0, 88], sizes = [8, 8], strides = [1, 1]} : vector<8x96xf32> to vector<8x8xf32>
    %83 = arith.truncf %82 : vector<8x8xf32> to vector<8x8xbf16>
    %cst_27 = arith.constant dense<0.000000e+00> : vector<8x8xf32>
    %84 = tpu.matmul %79, %81, %cst_27 {dimension_numbers = #tpu.dot_dimension_numbers<[1], [1], [0], [0], [0, 0, 1, 0], [], []>} : vector<8x8xbf16>, vector<8x8xbf16>, vector<8x8xf32> -> vector<8x8xf32>
    %cst_28 = arith.constant 0.353553385 : f32
    %85 = vector.broadcast %cst_28 : f32 to vector<8x8xf32>
    %86 = arith.mulf %84, %85 : vector<8x8xf32>
    %cst_29 = arith.constant dense<0xFF800000> : vector<8xf32>
    %87 = vector.multi_reduction <maximumf>, %86, %cst_29 [1] : vector<8x8xf32> to vector<8xf32>
    %88 = vector.shape_cast %87 : vector<8xf32> to vector<8x1xf32>
    %89 = vector.broadcast %88 : vector<8x1xf32> to vector<8x8xf32>
    %90 = arith.subf %86, %89 : vector<8x8xf32>
    %91 = math.exp %90 : vector<8x8xf32>
    %cst_30 = arith.constant dense<0.000000e+00> : vector<8xf32>
    %92 = vector.multi_reduction <add>, %91, %cst_30 [1] : vector<8x8xf32> to vector<8xf32>
    %93 = vector.shape_cast %92 : vector<8xf32> to vector<8x1xf32>
    %94 = tpu.reciprocal %93 : vector<8x1xf32> -> vector<8x1xf32>
    %95 = vector.broadcast %94 : vector<8x1xf32> to vector<8x8xf32>
    %96 = arith.mulf %91, %95 : vector<8x8xf32>
    %97 = arith.truncf %96 : vector<8x8xf32> to vector<8x8xbf16>
    %cst_31 = arith.constant dense<0.000000e+00> : vector<8x8xf32>
    %98 = tpu.matmul %97, %83, %cst_31 {dimension_numbers = #tpu.dot_dimension_numbers<[1], [0], [0], [1], [0, 0, 1, 1], [], []>} : vector<8x8xbf16>, vector<8x8xbf16>, vector<8x8xf32> -> vector<8x8xf32>
    %c0_32 = arith.constant 0 : index
    %c24 = arith.constant 24 : index
    %99 = vector.load %arg17[%c0_32, %c24] : memref<8x32xf32, #tpu.memory_space<vmem>>, vector<8x8xf32>
    tpu.vector_store %arg17[%c0_32, %c24], %98 {strides = array<i32>} : memref<8x32xf32, #tpu.memory_space<vmem>>, vector<8x8xf32>,
    %c0_33 = arith.constant 0 : index
    %c0_34 = arith.constant 0 : index
    %100 = vector.load %arg17[%c0_33, %c0_34] : memref<8x32xf32, #tpu.memory_space<vmem>>, vector<8x32xf32>
    %101 = arith.truncf %100 : vector<8x32xf32> to vector<8x32xbf16>
    %c0_35 = arith.constant 0 : index
    %c0_36 = arith.constant 0 : index
    %c0_37 = arith.constant 0 : index
    %102 = vector.load %arg5[%c0_35, %c0_36, %c0_37] : memref<1x32x32xbf16, #tpu.memory_space<vmem>>, vector<1x32x32xbf16>
    %103 = vector.shape_cast %102 : vector<1x32x32xbf16> to vector<32x32xbf16>
    %cst_38 = arith.constant dense<0.000000e+00> : vector<8x32xf32>
    %104 = tpu.matmul %101, %103, %cst_38 {dimension_numbers = #tpu.dot_dimension_numbers<[1], [0], [0], [1], [0, 0, 1, 1], [], []>} : vector<8x32xbf16>, vector<32x32xbf16>, vector<8x32xf32> -> vector<8x32xf32>
    %c0_39 = arith.constant 0 : index
    %c0_40 = arith.constant 0 : index
    %c0_41 = arith.constant 0 : index
    %105 = vector.load %arg6[%c0_39, %c0_40, %c0_41] : memref<1x1x32xf32, #tpu.memory_space<vmem>>, vector<1x1x32xf32>
    %106 = vector.shape_cast %105 : vector<1x1x32xf32> to vector<1x32xf32>
    %107 = vector.broadcast %106 : vector<1x32xf32> to vector<8x32xf32>
    %108 = arith.addf %104, %107 : vector<8x32xf32>
    %109 = arith.addf %3, %108 : vector<8x32xf32>
    %c0_42 = arith.constant 0 : index
    %c0_43 = arith.constant 0 : index
    %c0_44 = arith.constant 0 : index
    %110 = vector.load %arg7[%c0_42, %c0_43, %c0_44] : memref<1x1x32xf32, #tpu.memory_space<vmem>>, vector<1x1x32xf32>
    %111 = vector.shape_cast %110 : vector<1x1x32xf32> to vector<1x32xf32>
    %c0_45 = arith.constant 0 : index
    %c0_46 = arith.constant 0 : index
    %c0_47 = arith.constant 0 : index
    %112 = vector.load %arg8[%c0_45, %c0_46, %c0_47] : memref<1x1x32xf32, #tpu.memory_space<vmem>>, vector<1x1x32xf32>
    %113 = vector.shape_cast %112 : vector<1x1x32xf32> to vector<1x32xf32>
    %cst_48 = arith.constant dense<0.000000e+00> : vector<8xf32>
    %114 = vector.multi_reduction <add>, %109, %cst_48 [1] : vector<8x32xf32> to vector<8xf32>
    %115 = vector.shape_cast %114 : vector<8xf32> to vector<8x1xf32>
    %cst_49 = arith.constant 3.200000e+01 : f32
    %116 = vector.broadcast %cst_49 : f32 to vector<8x1xf32>
    %117 = arith.divf %115, %116 : vector<8x1xf32>
    %118 = vector.broadcast %117 : vector<8x1xf32> to vector<8x32xf32>
    %119 = arith.subf %109, %118 : vector<8x32xf32>
    %120 = arith.mulf %119, %119 : vector<8x32xf32>
    %cst_50 = arith.constant dense<0.000000e+00> : vector<8xf32>
    %121 = vector.multi_reduction <add>, %120, %cst_50 [1] : vector<8x32xf32> to vector<8xf32>
    %122 = vector.shape_cast %121 : vector<8xf32> to vector<8x1xf32>
    %cst_51 = arith.constant 3.200000e+01 : f32
    %123 = vector.broadcast %cst_51 : f32 to vector<8x1xf32>
    %124 = arith.divf %122, %123 : vector<8x1xf32>
    %125 = vector.broadcast %117 : vector<8x1xf32> to vector<8x32xf32>
    %126 = arith.subf %109, %125 : vector<8x32xf32>
    %cst_52 = arith.constant 9.99999974E-6 : f32
    %127 = vector.broadcast %cst_52 : f32 to vector<8x1xf32>
    %128 = arith.addf %124, %127 : vector<8x1xf32>
    %129 = math.rsqrt %128 : vector<8x1xf32>
    %130 = vector.broadcast %129 : vector<8x1xf32> to vector<8x32xf32>
    %131 = arith.mulf %126, %130 : vector<8x32xf32>
    %132 = vector.broadcast %111 : vector<1x32xf32> to vector<8x32xf32>
    %133 = arith.mulf %131, %132 : vector<8x32xf32>
    %134 = vector.broadcast %113 : vector<1x32xf32> to vector<8x32xf32>
    %135 = arith.addf %133, %134 : vector<8x32xf32>
    %136 = arith.truncf %135 : vector<8x32xf32> to vector<8x32xbf16>
    %c0_53 = arith.constant 0 : index
    %c0_54 = arith.constant 0 : index
    %c0_55 = arith.constant 0 : index
    %137 = vector.load %arg9[%c0_53, %c0_54, %c0_55] : memref<1x32x64xbf16, #tpu.memory_space<vmem>>, vector<1x32x64xbf16>
    %138 = vector.shape_cast %137 : vector<1x32x64xbf16> to vector<32x64xbf16>
    %cst_56 = arith.constant dense<0.000000e+00> : vector<8x64xf32>
    %139 = tpu.matmul %136, %138, %cst_56 {dimension_numbers = #tpu.dot_dimension_numbers<[1], [0], [0], [1], [0, 0, 1, 1], [], []>} : vector<8x32xbf16>, vector<32x64xbf16>, vector<8x64xf32> -> vector<8x64xf32>
    %c0_57 = arith.constant 0 : index
    %c0_58 = arith.constant 0 : index
    %c0_59 = arith.constant 0 : index
    %140 = vector.load %arg10[%c0_57, %c0_58, %c0_59] : memref<1x1x64xf32, #tpu.memory_space<vmem>>, vector<1x1x64xf32>
    %141 = vector.shape_cast %140 : vector<1x1x64xf32> to vector<1x64xf32>
    %142 = vector.broadcast %141 : vector<1x64xf32> to vector<8x64xf32>
    %143 = arith.addf %139, %142 : vector<8x64xf32>
    %cst_60 = arith.constant 0.000000e+00 : f32
    %144 = vector.broadcast %cst_60 : f32 to vector<8x64xf32>
    %145 = arith.maximumf %143, %144 : vector<8x64xf32>
    %146 = arith.truncf %145 : vector<8x64xf32> to vector<8x64xbf16>
    %c0_61 = arith.constant 0 : index
    %c0_62 = arith.constant 0 : index
    %c0_63 = arith.constant 0 : index
    %147 = vector.load %arg11[%c0_61, %c0_62, %c0_63] : memref<1x64x32xbf16, #tpu.memory_space<vmem>>, vector<1x64x32xbf16>
    %148 = vector.shape_cast %147 : vector<1x64x32xbf16> to vector<64x32xbf16>
    %cst_64 = arith.constant dense<0.000000e+00> : vector<8x32xf32>
    %149 = tpu.matmul %146, %148, %cst_64 {dimension_numbers = #tpu.dot_dimension_numbers<[1], [0], [0], [1], [0, 0, 1, 1], [], []>} : vector<8x64xbf16>, vector<64x32xbf16>, vector<8x32xf32> -> vector<8x32xf32>
    %c0_65 = arith.constant 0 : index
    %c0_66 = arith.constant 0 : index
    %c0_67 = arith.constant 0 : index
    %150 = vector.load %arg12[%c0_65, %c0_66, %c0_67] : memref<1x1x32xf32, #tpu.memory_space<vmem>>, vector<1x1x32xf32>
    %151 = vector.shape_cast %150 : vector<1x1x32xf32> to vector<1x32xf32>
    %152 = vector.broadcast %151 : vector<1x32xf32> to vector<8x32xf32>
    %153 = arith.addf %149, %152 : vector<8x32xf32>
    %154 = arith.addf %135, %153 : vector<8x32xf32>
    %c0_68 = arith.constant 0 : index
    %c0_69 = arith.constant 0 : index
    %c0_70 = arith.constant 0 : index
    %155 = vector.load %arg13[%c0_68, %c0_69, %c0_70] : memref<1x1x32xf32, #tpu.memory_space<vmem>>, vector<1x1x32xf32>
    %156 = vector.shape_cast %155 : vector<1x1x32xf32> to vector<1x32xf32>
    %c0_71 = arith.constant 0 : index
    %c0_72 = arith.constant 0 : index
    %c0_73 = arith.constant 0 : index
    %157 = vector.load %arg14[%c0_71, %c0_72, %c0_73] : memref<1x1x32xf32, #tpu.memory_space<vmem>>, vector<1x1x32xf32>
    %158 = vector.shape_cast %157 : vector<1x1x32xf32> to vector<1x32xf32>
    %cst_74 = arith.constant dense<0.000000e+00> : vector<8xf32>
    %159 = vector.multi_reduction <add>, %154, %cst_74 [1] : vector<8x32xf32> to vector<8xf32>
    %160 = vector.shape_cast %159 : vector<8xf32> to vector<8x1xf32>
    %cst_75 = arith.constant 3.200000e+01 : f32
    %161 = vector.broadcast %cst_75 : f32 to vector<8x1xf32>
    %162 = arith.divf %160, %161 : vector<8x1xf32>
    %163 = vector.broadcast %162 : vector<8x1xf32> to vector<8x32xf32>
    %164 = arith.subf %154, %163 : vector<8x32xf32>
    %165 = arith.mulf %164, %164 : vector<8x32xf32>
    %cst_76 = arith.constant dense<0.000000e+00> : vector<8xf32>
    %166 = vector.multi_reduction <add>, %165, %cst_76 [1] : vector<8x32xf32> to vector<8xf32>
    %167 = vector.shape_cast %166 : vector<8xf32> to vector<8x1xf32>
    %cst_77 = arith.constant 3.200000e+01 : f32
    %168 = vector.broadcast %cst_77 : f32 to vector<8x1xf32>
    %169 = arith.divf %167, %168 : vector<8x1xf32>
    %170 = vector.broadcast %162 : vector<8x1xf32> to vector<8x32xf32>
    %171 = arith.subf %154, %170 : vector<8x32xf32>
    %cst_78 = arith.constant 9.99999974E-6 : f32
    %172 = vector.broadcast %cst_78 : f32 to vector<8x1xf32>
    %173 = arith.addf %169, %172 : vector<8x1xf32>
    %174 = math.rsqrt %173 : vector<8x1xf32>
    %175 = vector.broadcast %174 : vector<8x1xf32> to vector<8x32xf32>
    %176 = arith.mulf %171, %175 : vector<8x32xf32>
    %177 = vector.broadcast %156 : vector<1x32xf32> to vector<8x32xf32>
    %178 = arith.mulf %176, %177 : vector<8x32xf32>
    %179 = vector.broadcast %158 : vector<1x32xf32> to vector<8x32xf32>
    %180 = arith.addf %178, %179 : vector<8x32xf32>
    %c0_79 = arith.constant 0 : index
    %c0_80 = arith.constant 0 : index
    %181 = vector.load %arg16[%c0_79, %c0_80] : memref<8x32xf32, #tpu.memory_space<vmem>>, vector<8x32xf32>
    tpu.vector_store %arg16[%c0_79, %c0_80], %180 {strides = array<i32>} : memref<8x32xf32, #tpu.memory_space<vmem>>, vector<8x32xf32>,
    %c0_81 = arith.constant 0 : index
    %c0_82 = arith.constant 0 : index
    %c0_83 = arith.constant 0 : index
    %182 = vector.load %arg15[%c0_81, %c0_82, %c0_83] : memref<1x8x32xf32, #tpu.memory_space<vmem>>, vector<1x8x32xf32>
    %183 = vector.shape_cast %182 : vector<1x8x32xf32> to vector<8x32xf32>
    %184 = vector.shape_cast %180 : vector<8x32xf32> to vector<1x8x32xf32>
    tpu.vector_store %arg15[%c0_81, %c0_82, %c0_83], %184 {strides = array<i32>} : memref<1x8x32xf32, #tpu.memory_space<vmem>>, vector<1x8x32xf32>,
    return
  }
  func.func @transform_0(%arg0: i32, %arg1: i32) -> (i32, i32, i32) {
    %c0_i32 = arith.constant 0 : i32
    %c0_i32_0 = arith.constant 0 : i32
    %c0_i32_1 = arith.constant 0 : i32
    return %arg0, %c0_i32, %c0_i32_0 : i32, i32, i32
  }
  func.func @transform_1(%arg0: i32, %arg1: i32) -> (i32, i32, i32) {
    %c0_i32 = arith.constant 0 : i32
    %c0_i32_0 = arith.constant 0 : i32
    %c0_i32_1 = arith.constant 0 : i32
    return %arg1, %c0_i32, %c0_i32_0 : i32, i32, i32
  }
  func.func @transform_2(%arg0: i32, %arg1: i32) -> (i32, i32, i32) {
    %c0_i32 = arith.constant 0 : i32
    %c0_i32_0 = arith.constant 0 : i32
    %c0_i32_1 = arith.constant 0 : i32
    return %arg1, %c0_i32, %c0_i32_0 : i32, i32, i32
  }
  func.func @transform_3(%arg0: i32, %arg1: i32) -> (i32, i32, i32) {
    %c0_i32 = arith.constant 0 : i32
    %c0_i32_0 = arith.constant 0 : i32
    %c0_i32_1 = arith.constant 0 : i32
    return %arg1, %c0_i32, %c0_i32_0 : i32, i32, i32
  }
  func.func @transform_4(%arg0: i32, %arg1: i32) -> (i32, i32, i32) {
    %c0_i32 = arith.constant 0 : i32
    %c0_i32_0 = arith.constant 0 : i32
    %c0_i32_1 = arith.constant 0 : i32
    return %arg1, %c0_i32, %c0_i32_0 : i32, i32, i32
  }
  func.func @transform_5(%arg0: i32, %arg1: i32) -> (i32, i32, i32) {
    %c0_i32 = arith.constant 0 : i32
    %c0_i32_0 = arith.constant 0 : i32
    %c0_i32_1 = arith.constant 0 : i32
    return %arg1, %c0_i32, %c0_i32_0 : i32, i32, i32
  }
  func.func @transform_6(%arg0: i32, %arg1: i32) -> (i32, i32, i32) {
    %c0_i32 = arith.constant 0 : i32
    %c0_i32_0 = arith.constant 0 : i32
    %c0_i32_1 = arith.constant 0 : i32
    return %arg1, %c0_i32, %c0_i32_0 : i32, i32, i32
  }
  func.func @transform_7(%arg0: i32, %arg1: i32) -> (i32, i32, i32) {
    %c0_i32 = arith.constant 0 : i32
    %c0_i32_0 = arith.constant 0 : i32
    %c0_i32_1 = arith.constant 0 : i32
    return %arg1, %c0_i32, %c0_i32_0 : i32, i32, i32
  }
  func.func @transform_8(%arg0: i32, %arg1: i32) -> (i32, i32, i32) {
    %c0_i32 = arith.constant 0 : i32
    %c0_i32_0 = arith.constant 0 : i32
    %c0_i32_1 = arith.constant 0 : i32
    return %arg1, %c0_i32, %c0_i32_0 : i32, i32, i32
  }
  func.func @transform_9(%arg0: i32, %arg1: i32) -> (i32, i32, i32) {
    %c0_i32 = arith.constant 0 : i32
    %c0_i32_0 = arith.constant 0 : i32
    %c0_i32_1 = arith.constant 0 : i32
    return %arg1, %c0_i32, %c0_i32_0 : i32, i32, i32
  }
  func.func @transform_10(%arg0: i32, %arg1: i32) -> (i32, i32, i32) {
    %c0_i32 = arith.constant 0 : i32
    %c0_i32_0 = arith.constant 0 : i32
    %c0_i32_1 = arith.constant 0 : i32
    return %arg1, %c0_i32, %c0_i32_0 : i32, i32, i32
  }
  func.func @transform_11(%arg0: i32, %arg1: i32) -> (i32, i32, i32) {
    %c0_i32 = arith.constant 0 : i32
    %c0_i32_0 = arith.constant 0 : i32
    %c0_i32_1 = arith.constant 0 : i32
    return %arg1, %c0_i32, %c0_i32_0 : i32, i32, i32
  }
  func.func @transform_12(%arg0: i32, %arg1: i32) -> (i32, i32, i32) {
    %c0_i32 = arith.constant 0 : i32
    %c0_i32_0 = arith.constant 0 : i32
    %c0_i32_1 = arith.constant 0 : i32
    return %arg1, %c0_i32, %c0_i32_0 : i32, i32, i32
  }
  func.func @transform_13(%arg0: i32, %arg1: i32) -> (i32, i32, i32) {
    %c0_i32 = arith.constant 0 : i32
    %c0_i32_0 = arith.constant 0 : i32
    %c0_i32_1 = arith.constant 0 : i32
    return %arg0, %c0_i32, %c0_i32_0 : i32, i32, i32
  }
}

</mosaic_0001>

<llo_original>
// kernel: tpu_custom_call.1
$region0: #{tpu_custom_call.1}
  #allocation0 [shape = 'u32[]', space=smem, size = 0x4, offset = 0x4, fixed_abs, tag = 'smem constant byte address 0x4 - core index']
  #allocation1 [shape = 'u32[144,128]{1,0:T(1,128)}', space=vmem, size = 0x12000, scoped, tag = 'internal scratch']
  #allocation2 [shape = 'f32[8,32]{1,0:T(8,128)}', space=vmem, size = 0x1000, scoped, tag = 'scratch operand']
  #allocation3 [shape = 'f32[8,32]{1,0:T(8,128)}', space=vmem, size = 0x1000, scoped, tag = 'scratch operand']
  %s0 = inlined_call_operand.hbm [shape: f32[2,8,32], index: 0, kind: input, shape index: {}]
  %s1 = inlined_call_operand.vmem [shape: bf16[2,32,96], index: 1, kind: input, shape index: {}]
  %s2 = inlined_call_operand.vmem [shape: f32[2,1,96], index: 2, kind: input, shape index: {}]
  %s3 = inlined_call_operand.vmem [shape: bf16[2,32,32], index: 3, kind: input, shape index: {}]
  %s4 = inlined_call_operand.hbm [shape: f32[2,1,32], index: 4, kind: input, shape index: {}]
  %s5 = inlined_call_operand.hbm [shape: f32[2,1,32], index: 5, kind: input, shape index: {}]
  %s6 = inlined_call_operand.hbm [shape: f32[2,1,32], index: 6, kind: input, shape index: {}]
  %s7 = inlined_call_operand.vmem [shape: bf16[2,32,64], index: 7, kind: input, shape index: {}]
  %s8 = inlined_call_operand.hbm [shape: f32[2,1,64], index: 8, kind: input, shape index: {}]
  %s9 = inlined_call_operand.vmem [shape: bf16[2,64,32], index: 9, kind: input, shape index: {}]
  %s10 = inlined_call_operand.vmem [shape: f32[2,1,32], index: 10, kind: input, shape index: {}]
  %s11 = inlined_call_operand.vmem [shape: f32[2,1,32], index: 11, kind: input, shape index: {}]
  %s12 = inlined_call_operand.vmem [shape: f32[2,1,32], index: 12, kind: input, shape index: {}]
  %s13 = inlined_call_operand.hbm [shape: f32[2,8,32], index: 13, kind: output, shape index: {}]
  %s14 = sld [smem:[#allocation0]]
  $region109: #{tpu_custom_call.1} parent=0
    _
  %s16 = ssub.s32 1, %s14
  %s17 = scalar_select 0, %s16, %s14
  $region1: #{tpu_custom_call.1} parent=0
    #allocation4 [shape = 'u8[8192]{0}', space=vmem, size = 0x2000, scoped, tag = 'input window, operand 0']
    #allocation5 [shape = 's32[2]{0}', space=sflag, size = 0x8, scoped, tag = 'scoped memory for tpu_custom_call.1']
    #allocation6 [shape = 's32[2]{0}', space=sflag, size = 0x8, scoped, tag = 'scoped memory for tpu_custom_call.1']
    #allocation7 [shape = 'u8[1024]{0}', space=vmem, size = 0x400, scoped, tag = 'input window, operand 4']
    #allocation8 [shape = 's32[2]{0}', space=sflag, size = 0x8, scoped, tag = 'scoped memory for tpu_custom_call.1']
    #allocation9 [shape = 'u8[1024]{0}', space=vmem, size = 0x400, scoped, tag = 'input window, operand 5']
    #allocation10 [shape = 'u8[1024]{0}', space=vmem, size = 0x400, scoped, tag = 'input window, operand 6']
    #allocation11 [shape = 's32[2]{0}', space=sflag, size = 0x8, scoped, tag = 'scoped memory for tpu_custom_call.1']
    #allocation12 [shape = 'u8[1024]{0}', space=vmem, size = 0x400, scoped, tag = 'input window, operand 8']
    #allocation13 [shape = 'u8[8192]{0}', space=vmem, size = 0x2000, scoped, tag = 'output window, operand 0']
    %18 = vsyncpa [#allocation5], 0
    %s19 = scalar_lea.sflag [#allocation5], 1
    %20 = vsyncpa %s19, 0
    %21 = vsyncpa [#allocation8], 0
    %s22 = scalar_lea.sflag [#allocation8], 1
    %23 = vsyncpa %s22, 0
    %24 = vsyncpa [#allocation11], 0
    %s25 = scalar_lea.sflag [#allocation11], 1
    %26 = vsyncpa %s25, 0
    %27 = vsyncpa [#allocation6], 0
    %s28 = scalar_lea.sflag [#allocation6], 1
    %29 = vsyncpa %s28, 0
    loop: start=0, step=1, limit=6
    $region2: #{tpu_custom_call.1} parent=1 // loop_pre_header
      _
    $region3: #{tpu_custom_call.1} parent=1 // loop_header
      %s31 = sphi 0, %s35
      %p32 = scmp.ge.s32.totalorder %s31, 6
      %s38 = sphi 0, %s50
      %s39 = sphi 0, %s46
      %s40 = sphi 0, %s38
      %s41 = sphi 0, %s39
      %s42 = sphi 0, %s40
      %s43 = sphi 0, %s41
      %s53 = sphi 0, %s55
      %s56 = sphi 0, %s53
      %s57 = sphi 0, %s56
      %s73 = sphi 0, %s57
      %s79 = sphi 0, %s81
      %s82 = sphi 0, %s79
      %s83 = sphi 0, %s82
      %s99 = sphi 0, %s83
      %s105 = sphi 0, %s107
      %s108 = sphi 0, %s105
      %s109 = sphi 0, %s108
      %s125 = sphi 0, %s109
      %s131 = sphi 0, %s133
      %s134 = sphi 0, %s131
      %s135 = sphi 0, %s134
      %s151 = sphi 0, %s135
      %s157 = sphi 0, %s159
      %s160 = sphi 0, %s157
      %s161 = sphi 0, %s160
      %s177 = sphi 0, %s161
      %s183 = sphi 0, %s185
      %s186 = sphi 0, %s183
      %s187 = sphi 0, %s186
      %s203 = sphi 0, %s187
      %s209 = sphi 0, %s211
      %s212 = sphi 0, %s209
      %s213 = sphi 0, %s212
      %s229 = sphi 0, %s213
      %s235 = sphi 0, %s237
      %s238 = sphi 0, %s235
      %s239 = sphi 0, %s238
      %s255 = sphi 0, %s239
      %s261 = sphi 0, %s263
      %s264 = sphi 0, %s261
      %s265 = sphi 0, %s264
      %s281 = sphi 0, %s265
      %s287 = sphi 0, %s289
      %s290 = sphi 0, %s287
      %s291 = sphi 0, %s290
      %s307 = sphi 0, %s291
      %s313 = sphi 0, %s315
      %s316 = sphi 0, %s313
      %s317 = sphi 0, %s316
      %s333 = sphi 0, %s317
      %s339 = sphi 0, %s341
      %s342 = sphi 0, %s339
      %s343 = sphi 0, %s342
      %s359 = sphi 0, %s343
      %s365 = sphi 0, %s367
      %s368 = sphi 0, %s365
      %s369 = sphi 0, %s368
      %s385 = sphi 0, %s369
      %s391 = sphi 0, %s393
      %s394 = sphi 0, %s391
      %s395 = sphi 0, %s394
      %s411 = sphi 0, %s395
    $region4: #{tpu_custom_call.1} parent=1 // loop_header_branch
      %34 = sbr.rel (%p32) target = $region8
    $region5: #{tpu_custom_call.1} parent=1 // loop_body
      %s36 = ssub.s32 %s31, 1
      %s37 = ssub.s32 %s31, 2
      %s44 = sadd.s32 1, %s39
      %p45 = scmp.ge.s32.totalorder %s44, 2
      %s46 = scalar_select %p45, 0, %s44
      %s47 = sadd.s32 1, %s38
      %s48 = scalar_select %p45, %s47, %s38
      %p49 = scmp.ge.s32.totalorder %s48, 2
      %s50 = scalar_select %p49, 0, %s48
      %s51 = ssub.s32 %s38, %s50
      %p52 = scmp.eq.s32.totalorder %s51, 0
      %s54 = sadd.s32 %s53, 1
      %s55 = scalar_select %p52, %s53, %s54
      %p58 = pneg %p52
      %p59 = scmp.eq.s32.totalorder %s31, 3
      %p60 = por %p58, %p59
      %p61 = scmp.ne.s32.totalorder %s53, %s56
      %p62 = scmp.eq.s32.totalorder %s31, 0
      %p63 = por %p61, %p62
      %p64 = scmp.ne.s32.totalorder %s53, %s56
      %p65 = scmp.eq.s32.totalorder %s36, 3
      %p66 = por %p64, %p65
      %p67 = scmp.ne.s32.totalorder %s56, %s57
      %p68 = scmp.eq.s32.totalorder %s36, 0
      %p69 = por %p67, %p68
      %p70 = scmp.ne.s32.totalorder %s56, %s57
      %p71 = scmp.eq.s32.totalorder %s37, 3
      %p72 = por %p70, %p71
      %p74 = scmp.ne.s32.totalorder %s57, %s73
      %p75 = scmp.eq.s32.totalorder %s37, 0
      %p76 = por %p74, %p75
      %s77 = ssub.s32 %s39, %s46
      %p78 = scmp.eq.s32.totalorder %s77, 0
      %s80 = sadd.s32 %s79, 1
      %s81 = scalar_select %p78, %s79, %s80
      %p84 = pneg %p78
      %p85 = scmp.eq.s32.totalorder %s31, 3
      %p86 = por %p84, %p85
      %p87 = scmp.ne.s32.totalorder %s79, %s82
      %p88 = scmp.eq.s32.totalorder %s31, 0
      %p89 = por %p87, %p88
      %p90 = scmp.ne.s32.totalorder %s79, %s82
      %p91 = scmp.eq.s32.totalorder %s36, 3
      %p92 = por %p90, %p91
      %p93 = scmp.ne.s32.totalorder %s82, %s83
      %p94 = scmp.eq.s32.totalorder %s36, 0
      %p95 = por %p93, %p94
      %p96 = scmp.ne.s32.totalorder %s82, %s83
      %p97 = scmp.eq.s32.totalorder %s37, 3
      %p98 = por %p96, %p97
      %p100 = scmp.ne.s32.totalorder %s83, %s99
      %p101 = scmp.eq.s32.totalorder %s37, 0
      %p102 = por %p100, %p101
      %s103 = ssub.s32 %s39, %s46
      %p104 = scmp.eq.s32.totalorder %s103, 0
      %s106 = sadd.s32 %s105, 1
      %s107 = scalar_select %p104, %s105, %s106
      %p110 = pneg %p104
      %p111 = scmp.eq.s32.totalorder %s31, 3
      %p112 = por %p110, %p111
      %p113 = scmp.ne.s32.totalorder %s105, %s108
      %p114 = scmp.eq.s32.totalorder %s31, 0
      %p115 = por %p113, %p114
      %p116 = scmp.ne.s32.totalorder %s105, %s108
      %p117 = scmp.eq.s32.totalorder %s36, 3
      %p118 = por %p116, %p117
      %p119 = scmp.ne.s32.totalorder %s108, %s109
      %p120 = scmp.eq.s32.totalorder %s36, 0
      %p121 = por %p119, %p120
      %p122 = scmp.ne.s32.totalorder %s108, %s109
      %p123 = scmp.eq.s32.totalorder %s37, 3
      %p124 = por %p122, %p123
      %p126 = scmp.ne.s32.totalorder %s109, %s125
      %p127 = scmp.eq.s32.totalorder %s37, 0
      %p128 = por %p126, %p127
      %s129 = ssub.s32 %s39, %s46
      %p130 = scmp.eq.s32.totalorder %s129, 0
      %s132 = sadd.s32 %s131, 1
      %s133 = scalar_select %p130, %s131, %s132
      %p136 = pneg %p130
      %p137 = scmp.eq.s32.totalorder %s31, 3
      %p138 = por %p136, %p137
      %p139 = scmp.ne.s32.totalorder %s131, %s134
      %p140 = scmp.eq.s32.totalorder %s31, 0
      %p141 = por %p139, %p140
      %p142 = scmp.ne.s32.totalorder %s131, %s134
      %p143 = scmp.eq.s32.totalorder %s36, 3
      %p144 = por %p142, %p143
      %p145 = scmp.ne.s32.totalorder %s134, %s135
      %p146 = scmp.eq.s32.totalorder %s36, 0
      %p147 = por %p145, %p146
      %p148 = scmp.ne.s32.totalorder %s134, %s135
      %p149 = scmp.eq.s32.totalorder %s37, 3
      %p150 = por %p148, %p149
      %p152 = scmp.ne.s32.totalorder %s135, %s151
      %p153 = scmp.eq.s32.totalorder %s37, 0
      %p154 = por %p152, %p153
      %s155 = ssub.s32 %s39, %s46
      %p156 = scmp.eq.s32.totalorder %s155, 0
      %s158 = sadd.s32 %s157, 1
      %s159 = scalar_select %p156, %s157, %s158
      %p162 = pneg %p156
      %p163 = scmp.eq.s32.totalorder %s31, 3
      %p164 = por %p162, %p163
      %p165 = scmp.ne.s32.totalorder %s157, %s160
      %p166 = scmp.eq.s32.totalorder %s31, 0
      %p167 = por %p165, %p166
      %p168 = scmp.ne.s32.totalorder %s157, %s160
      %p169 = scmp.eq.s32.totalorder %s36, 3
      %p170 = por %p168, %p169
      %p171 = scmp.ne.s32.totalorder %s160, %s161
      %p172 = scmp.eq.s32.totalorder %s36, 0
      %p173 = por %p171, %p172
      %p174 = scmp.ne.s32.totalorder %s160, %s161
      %p175 = scmp.eq.s32.totalorder %s37, 3
      %p176 = por %p174, %p175
      %p178 = scmp.ne.s32.totalorder %s161, %s177
      %p179 = scmp.eq.s32.totalorder %s37, 0
      %p180 = por %p178, %p179
      %s181 = ssub.s32 %s39, %s46
      %p182 = scmp.eq.s32.totalorder %s181, 0
      %s184 = sadd.s32 %s183, 1
      %s185 = scalar_select %p182, %s183, %s184
      %p188 = pneg %p182
      %p189 = scmp.eq.s32.totalorder %s31, 3
      %p190 = por %p188, %p189
      %p191 = scmp.ne.s32.totalorder %s183, %s186
      %p192 = scmp.eq.s32.totalorder %s31, 0
      %p193 = por %p191, %p192
      %p194 = scmp.ne.s32.totalorder %s183, %s186
      %p195 = scmp.eq.s32.totalorder %s36, 3
      %p196 = por %p194, %p195
      %p197 = scmp.ne.s32.totalorder %s186, %s187
      %p198 = scmp.eq.s32.totalorder %s36, 0
      %p199 = por %p197, %p198
      %p200 = scmp.ne.s32.totalorder %s186, %s187
      %p201 = scmp.eq.s32.totalorder %s37, 3
      %p202 = por %p200, %p201
      %p204 = scmp.ne.s32.totalorder %s187, %s203
      %p205 = scmp.eq.s32.totalorder %s37, 0
      %p206 = por %p204, %p205
      %s207 = ssub.s32 %s39, %s46
      %p208 = scmp.eq.s32.totalorder %s207, 0
      %s210 = sadd.s32 %s209, 1
      %s211 = scalar_select %p208, %s209, %s210
      %p214 = pneg %p208
      %p215 = scmp.eq.s32.totalorder %s31, 3
      %p216 = por %p214, %p215
      %p217 = scmp.ne.s32.totalorder %s209, %s212
      %p218 = scmp.eq.s32.totalorder %s31, 0
      %p219 = por %p217, %p218
      %p220 = scmp.ne.s32.totalorder %s209, %s212
      %p221 = scmp.eq.s32.totalorder %s36, 3
      %p222 = por %p220, %p221
      %p223 = scmp.ne.s32.totalorder %s212, %s213
      %p224 = scmp.eq.s32.totalorder %s36, 0
      %p225 = por %p223, %p224
      %p226 = scmp.ne.s32.totalorder %s212, %s213
      %p227 = scmp.eq.s32.totalorder %s37, 3
      %p228 = por %p226, %p227
      %p230 = scmp.ne.s32.totalorder %s213, %s229
      %p231 = scmp.eq.s32.totalorder %s37, 0
      %p232 = por %p230, %p231
      %s233 = ssub.s32 %s39, %s46
      %p234 = scmp.eq.s32.totalorder %s233, 0
      %s236 = sadd.s32 %s235, 1
      %s237 = scalar_select %p234, %s235, %s236
      %p240 = pneg %p234
      %p241 = scmp.eq.s32.totalorder %s31, 3
      %p242 = por %p240, %p241
      %p243 = scmp.ne.s32.totalorder %s235, %s238
      %p244 = scmp.eq.s32.totalorder %s31, 0
      %p245 = por %p243, %p244
      %p246 = scmp.ne.s32.totalorder %s235, %s238
      %p247 = scmp.eq.s32.totalorder %s36, 3
      %p248 = por %p246, %p247
      %p249 = scmp.ne.s32.totalorder %s238, %s239
      %p250 = scmp.eq.s32.totalorder %s36, 0
      %p251 = por %p249, %p250
      %p252 = scmp.ne.s32.totalorder %s238, %s239
      %p253 = scmp.eq.s32.totalorder %s37, 3
      %p254 = por %p252, %p253
      %p256 = scmp.ne.s32.totalorder %s239, %s255
      %p257 = scmp.eq.s32.totalorder %s37, 0
      %p258 = por %p256, %p257
      %s259 = ssub.s32 %s39, %s46
      %p260 = scmp.eq.s32.totalorder %s259, 0
      %s262 = sadd.s32 %s261, 1
      %s263 = scalar_select %p260, %s261, %s262
      %p266 = pneg %p260
      %p267 = scmp.eq.s32.totalorder %s31, 3
      %p268 = por %p266, %p267
      %p269 = scmp.ne.s32.totalorder %s261, %s264
      %p270 = scmp.eq.s32.totalorder %s31, 0
      %p271 = por %p269, %p270
      %p272 = scmp.ne.s32.totalorder %s261, %s264
      %p273 = scmp.eq.s32.totalorder %s36, 3
      %p274 = por %p272, %p273
      %p275 = scmp.ne.s32.totalorder %s264, %s265
      %p276 = scmp.eq.s32.totalorder %s36, 0
      %p277 = por %p275, %p276
      %p278 = scmp.ne.s32.totalorder %s264, %s265
      %p279 = scmp.eq.s32.totalorder %s37, 3
      %p280 = por %p278, %p279
      %p282 = scmp.ne.s32.totalorder %s265, %s281
      %p283 = scmp.eq.s32.totalorder %s37, 0
      %p284 = por %p282, %p283
      %s285 = ssub.s32 %s39, %s46
      %p286 = scmp.eq.s32.totalorder %s285, 0
      %s288 = sadd.s32 %s287, 1
      %s289 = scalar_select %p286, %s287, %s288
      %p292 = pneg %p286
      %p293 = scmp.eq.s32.totalorder %s31, 3
      %p294 = por %p292, %p293
      %p295 = scmp.ne.s32.totalorder %s287, %s290
      %p296 = scmp.eq.s32.totalorder %s31, 0
      %p297 = por %p295, %p296
      %p298 = scmp.ne.s32.totalorder %s287, %s290
      %p299 = scmp.eq.s32.totalorder %s36, 3
      %p300 = por %p298, %p299
      %p301 = scmp.ne.s32.totalorder %s290, %s291
      %p302 = scmp.eq.s32.totalorder %s36, 0
      %p303 = por %p301, %p302
      %p304 = scmp.ne.s32.totalorder %s290, %s291
      %p305 = scmp.eq.s32.totalorder %s37, 3
      %p306 = por %p304, %p305
      %p308 = scmp.ne.s32.totalorder %s291, %s307
      %p309 = scmp.eq.s32.totalorder %s37, 0
      %p310 = por %p308, %p309
      %s311 = ssub.s32 %s39, %s46
      %p312 = scmp.eq.s32.totalorder %s311, 0
      %s314 = sadd.s32 %s313, 1
      %s315 = scalar_select %p312, %s313, %s314
      %p318 = pneg %p312
      %p319 = scmp.eq.s32.totalorder %s31, 3
      %p320 = por %p318, %p319
      %p321 = scmp.ne.s32.totalorder %s313, %s316
      %p322 = scmp.eq.s32.totalorder %s31, 0
      %p323 = por %p321, %p322
      %p324 = scmp.ne.s32.totalorder %s313, %s316
      %p325 = scmp.eq.s32.totalorder %s36, 3
      %p326 = por %p324, %p325
      %p327 = scmp.ne.s32.totalorder %s316, %s317
      %p328 = scmp.eq.s32.totalorder %s36, 0
      %p329 = por %p327, %p328
      %p330 = scmp.ne.s32.totalorder %s316, %s317
      %p331 = scmp.eq.s32.totalorder %s37, 3
      %p332 = por %p330, %p331
      %p334 = scmp.ne.s32.totalorder %s317, %s333
      %p335 = scmp.eq.s32.totalorder %s37, 0
      %p336 = por %p334, %p335
      %s337 = ssub.s32 %s39, %s46
      %p338 = scmp.eq.s32.totalorder %s337, 0
      %s340 = sadd.s32 %s339, 1
      %s341 = scalar_select %p338, %s339, %s340
      %p344 = pneg %p338
      %p345 = scmp.eq.s32.totalorder %s31, 3
      %p346 = por %p344, %p345
      %p347 = scmp.ne.s32.totalorder %s339, %s342
      %p348 = scmp.eq.s32.totalorder %s31, 0
      %p349 = por %p347, %p348
      %p350 = scmp.ne.s32.totalorder %s339, %s342
      %p351 = scmp.eq.s32.totalorder %s36, 3
      %p352 = por %p350, %p351
      %p353 = scmp.ne.s32.totalorder %s342, %s343
      %p354 = scmp.eq.s32.totalorder %s36, 0
      %p355 = por %p353, %p354
      %p356 = scmp.ne.s32.totalorder %s342, %s343
      %p357 = scmp.eq.s32.totalorder %s37, 3
      %p358 = por %p356, %p357
      %p360 = scmp.ne.s32.totalorder %s343, %s359
      %p361 = scmp.eq.s32.totalorder %s37, 0
      %p362 = por %p360, %p361
      %s363 = ssub.s32 %s39, %s46
      %p364 = scmp.eq.s32.totalorder %s363, 0
      %s366 = sadd.s32 %s365, 1
      %s367 = scalar_select %p364, %s365, %s366
      %p370 = pneg %p364
      %p371 = scmp.eq.s32.totalorder %s31, 3
      %p372 = por %p370, %p371
      %p373 = scmp.ne.s32.totalorder %s365, %s368
      %p374 = scmp.eq.s32.totalorder %s31, 0
      %p375 = por %p373, %p374
      %p376 = scmp.ne.s32.totalorder %s365, %s368
      %p377 = scmp.eq.s32.totalorder %s36, 3
      %p378 = por %p376, %p377
      %p379 = scmp.ne.s32.totalorder %s368, %s369
      %p380 = scmp.eq.s32.totalorder %s36, 0
      %p381 = por %p379, %p380
      %p382 = scmp.ne.s32.totalorder %s368, %s369
      %p383 = scmp.eq.s32.totalorder %s37, 3
      %p384 = por %p382, %p383
      %p386 = scmp.ne.s32.totalorder %s369, %s385
      %p387 = scmp.eq.s32.totalorder %s37, 0
      %p388 = por %p386, %p387
      %s389 = ssub.s32 %s38, %s50
      %p390 = scmp.eq.s32.totalorder %s389, 0
      %s392 = sadd.s32 %s391, 1
      %s393 = scalar_select %p390, %s391, %s392
      %p396 = pneg %p390
      %p397 = scmp.eq.s32.totalorder %s31, 3
      %p398 = por %p396, %p397
      %p399 = scmp.ne.s32.totalorder %s391, %s394
      %p400 = scmp.eq.s32.totalorder %s31, 0
      %p401 = por %p399, %p400
      %p402 = scmp.ne.s32.totalorder %s391, %s394
      %p403 = scmp.eq.s32.totalorder %s36, 3
      %p404 = por %p402, %p403
      %p405 = scmp.ne.s32.totalorder %s394, %s395
      %p406 = scmp.eq.s32.totalorder %s36, 0
      %p407 = por %p405, %p406
      %p408 = scmp.ne.s32.totalorder %s394, %s395
      %p409 = scmp.eq.s32.totalorder %s37, 3
      %p410 = por %p408, %p409
      %p412 = scmp.ne.s32.totalorder %s395, %s411
      %p413 = scmp.eq.s32.totalorder %s37, 0
      %p414 = por %p412, %p413
      %p415 = scmp.le.s32.totalorder 1, %s31
      %p416 = scmp.lt.s32.totalorder %s31, 5
      %p417 = pnand %p415, %p416
      %p418 = pneg %p417
      // Predicated region
      $region9: #{tpu_custom_call.1} parent=5 // pred_check
        _
      $region10: #{tpu_custom_call.1} parent=5 // pred_check_branch
        %420 = sbr.rel (%p417) target = $region12
      $region11: #{tpu_custom_call.1} parent=5 // pred_region
        %s421 = ssub.s32 %s31, 1
      $region12: #{tpu_custom_call.1} parent=5 // pred_fallthru
        _
      %p422 = scmp.lt.s32.totalorder %s31, 4
      // Predicated region
      $region13: #{tpu_custom_call.1} parent=5 // pred_check
        %p423 = pneg %p422
      $region14: #{tpu_custom_call.1} parent=5 // pred_check_branch
        %425 = sbr.rel (%p423) target = $region16
      $region15: #{tpu_custom_call.1} parent=5 // pred_region
        // Predicated region
        $region17: #{tpu_custom_call.1} parent=15 // pred_check
          %p426 = pneg %p63
        $region18: #{tpu_custom_call.1} parent=15 // pred_check_branch
          %428 = sbr.rel (%p426) target = $region20
        $region19: #{tpu_custom_call.1} parent=15 // pred_region
          %s429 = sand.u32 %s53, 1
          %s430 = scalar_lea.sflag [#allocation5], %s429
          %s431 = sand.u32 %s53, 1
          %s432 = smul.addr %s431, 8
          %s433 = scalar_lea.vmem [#allocation4], %s432
          %s435 = ssub.s32 128, 128
          %436 = vsyncadd %s430, %s435
          %s437 = smul.addr %s38, 128
          %s438 = scalar_lea.hbm %s0, %s437
          %s440 = sshll.u32 %s433, 4
          %s441 = int_to_ptr.vmem [resolvable:$true] %s440
          %443 = dma.hbm_to_vmem [thread:$0]  %s438, 128, %s441, %s430
        $region20: #{tpu_custom_call.1} parent=15 // pred_fallthru
          _
        // Predicated region
        $region21: #{tpu_custom_call.1} parent=15 // pred_check
          %p444 = pneg %p89
        $region22: #{tpu_custom_call.1} parent=15 // pred_check_branch
          %446 = sbr.rel (%p444) target = $region24
        $region23: #{tpu_custom_call.1} parent=15 // pred_region
          %p447 = scmp.lt.s32.totalorder %s39, 1
          %s448 = scalar_select %p447, %s39, 1
          %s449 = smul.addr %s448, 4
          %s450 = smul.addr %s449, 4
          %s451 = scalar_lea.vmem %s1, %s450
        $region24: #{tpu_custom_call.1} parent=15 // pred_fallthru
          _
        // Predicated region
        $region25: #{tpu_custom_call.1} parent=15 // pred_check
          %p452 = pneg %p115
        $region26: #{tpu_custom_call.1} parent=15 // pred_check_branch
          %454 = sbr.rel (%p452) target = $region28
        $region27: #{tpu_custom_call.1} parent=15 // pred_region
          %p455 = scmp.lt.s32.totalorder %s39, 1
          %s456 = scalar_select %p455, %s39, 1
          %s457 = scalar_lea.vmem %s2, %s456
        $region28: #{tpu_custom_call.1} parent=15 // pred_fallthru
          _
        // Predicated region
        $region29: #{tpu_custom_call.1} parent=15 // pred_check
          %p458 = pneg %p141
        $region30: #{tpu_custom_call.1} parent=15 // pred_check_branch
          %460 = sbr.rel (%p458) target = $region32
        $region31: #{tpu_custom_call.1} parent=15 // pred_region
          %p461 = scmp.lt.s32.totalorder %s39, 1
          %s462 = scalar_select %p461, %s39, 1
          %s463 = smul.addr %s462, 4
          %s464 = smul.addr %s463, 4
          %s465 = scalar_lea.vmem %s3, %s464
        $region32: #{tpu_custom_call.1} parent=15 // pred_fallthru
          _
        // Predicated region
        $region33: #{tpu_custom_call.1} parent=15 // pred_check
          %p466 = pneg %p167
        $region34: #{tpu_custom_call.1} parent=15 // pred_check_branch
          %468 = sbr.rel (%p466) target = $region36
        $region35: #{tpu_custom_call.1} parent=15 // pred_region
          %s469 = sand.u32 %s31, 1
          %s470 = scalar_lea.sflag [#allocation8], %s469
          %s471 = sand.u32 %s157, 1
          %s472 = scalar_lea.vmem [#allocation7], %s471
          %s474 = ssub.s32 16, 16
          %475 = vsyncadd %s470, %s474
          %s476 = smul.addr %s39, 16
          %s477 = scalar_lea.hbm %s4, %s476
          %s479 = sshll.u32 %s472, 4
          %s480 = int_to_ptr.vmem [resolvable:$true] %s479
          %482 = dma.hbm_to_vmem [thread:$0]  %s477, 16, %s480, %s470
        $region36: #{tpu_custom_call.1} parent=15 // pred_fallthru
          _
        // Predicated region
        $region37: #{tpu_custom_call.1} parent=15 // pred_check
          %p483 = pneg %p193
        $region38: #{tpu_custom_call.1} parent=15 // pred_check_branch
          %485 = sbr.rel (%p483) target = $region40
        $region39: #{tpu_custom_call.1} parent=15 // pred_region
          %s486 = sand.u32 %s31, 1
          %s487 = scalar_lea.sflag [#allocation8], %s486
          %s488 = sand.u32 %s183, 1
          %s489 = scalar_lea.vmem [#allocation9], %s488
          %s491 = ssub.s32 16, 16
          %492 = vsyncadd %s487, %s491
          %s493 = smul.addr %s39, 16
          %s494 = scalar_lea.hbm %s5, %s493
          %s496 = sshll.u32 %s489, 4
          %s497 = int_to_ptr.vmem [resolvable:$true] %s496
          %499 = dma.hbm_to_vmem [thread:$0]  %s494, 16, %s497, %s487
        $region40: #{tpu_custom_call.1} parent=15 // pred_fallthru
          _
        // Predicated region
        $region41: #{tpu_custom_call.1} parent=15 // pred_check
          %p500 = pneg %p219
        $region42: #{tpu_custom_call.1} parent=15 // pred_check_branch
          %502 = sbr.rel (%p500) target = $region44
        $region43: #{tpu_custom_call.1} parent=15 // pred_region
          %s503 = sand.u32 %s31, 1
          %s504 = scalar_lea.sflag [#allocation11], %s503
          %s505 = sand.u32 %s209, 1
          %s506 = scalar_lea.vmem [#allocation10], %s505
          %s508 = ssub.s32 16, 16
          %509 = vsyncadd %s504, %s508
          %s510 = smul.addr %s39, 16
          %s511 = scalar_lea.hbm %s6, %s510
          %s513 = sshll.u32 %s506, 4
          %s514 = int_to_ptr.vmem [resolvable:$true] %s513
          %516 = dma.hbm_to_vmem [thread:$0]  %s511, 16, %s514, %s504
        $region44: #{tpu_custom_call.1} parent=15 // pred_fallthru
          _
        // Predicated region
        $region45: #{tpu_custom_call.1} parent=15 // pred_check
          %p517 = pneg %p245
        $region46: #{tpu_custom_call.1} parent=15 // pred_check_branch
          %519 = sbr.rel (%p517) target = $region48
        $region47: #{tpu_custom_call.1} parent=15 // pred_region
          %p520 = scmp.lt.s32.totalorder %s39, 1
          %s521 = scalar_select %p520, %s39, 1
          %s522 = smul.addr %s521, 4
          %s523 = smul.addr %s522, 4
          %s524 = scalar_lea.vmem %s7, %s523
        $region48: #{tpu_custom_call.1} parent=15 // pred_fallthru
          _
        // Predicated region
        $region49: #{tpu_custom_call.1} parent=15 // pred_check
          %p525 = pneg %p271
        $region50: #{tpu_custom_call.1} parent=15 // pred_check_branch
          %527 = sbr.rel (%p525) target = $region52
        $region51: #{tpu_custom_call.1} parent=15 // pred_region
          %s528 = sand.u32 %s31, 1
          %s529 = scalar_lea.sflag [#allocation11], %s528
          %s530 = sand.u32 %s261, 1
          %s531 = scalar_lea.vmem [#allocation12], %s530
          %s533 = ssub.s32 16, 16
          %534 = vsyncadd %s529, %s533
          %s535 = smul.addr %s39, 16
          %s536 = scalar_lea.hbm %s8, %s535
          %s538 = sshll.u32 %s531, 4
          %s539 = int_to_ptr.vmem [resolvable:$true] %s538
          %541 = dma.hbm_to_vmem [thread:$0]  %s536, 16, %s539, %s529
        $region52: #{tpu_custom_call.1} parent=15 // pred_fallthru
          _
        // Predicated region
        $region53: #{tpu_custom_call.1} parent=15 // pred_check
          %p542 = pneg %p297
        $region54: #{tpu_custom_call.1} parent=15 // pred_check_branch
          %544 = sbr.rel (%p542) target = $region56
        $region55: #{tpu_custom_call.1} parent=15 // pred_region
          %p545 = scmp.lt.s32.totalorder %s39, 1
          %s546 = scalar_select %p545, %s39, 1
          %s547 = smul.addr %s546, 8
          %s548 = smul.addr %s547, 4
          %s549 = scalar_lea.vmem %s9, %s548
        $region56: #{tpu_custom_call.1} parent=15 // pred_fallthru
          _
        // Predicated region
        $region57: #{tpu_custom_call.1} parent=15 // pred_check
          %p550 = pneg %p323
        $region58: #{tpu_custom_call.1} parent=15 // pred_check_branch
          %552 = sbr.rel (%p550) target = $region60
        $region59: #{tpu_custom_call.1} parent=15 // pred_region
          %p553 = scmp.lt.s32.totalorder %s39, 1
          %s554 = scalar_select %p553, %s39, 1
          %s555 = scalar_lea.vmem %s10, %s554
        $region60: #{tpu_custom_call.1} parent=15 // pred_fallthru
          _
        // Predicated region
        $region61: #{tpu_custom_call.1} parent=15 // pred_check
          %p556 = pneg %p349
        $region62: #{tpu_custom_call.1} parent=15 // pred_check_branch
          %558 = sbr.rel (%p556) target = $region64
        $region63: #{tpu_custom_call.1} parent=15 // pred_region
          %p559 = scmp.lt.s32.totalorder %s39, 1
          %s560 = scalar_select %p559, %s39, 1
          %s561 = scalar_lea.vmem %s11, %s560
        $region64: #{tpu_custom_call.1} parent=15 // pred_fallthru
          _
        // Predicated region
        $region65: #{tpu_custom_call.1} parent=15 // pred_check
          %p562 = pneg %p375
        $region66: #{tpu_custom_call.1} parent=15 // pred_check_branch
          %564 = sbr.rel (%p562) target = $region68
        $region67: #{tpu_custom_call.1} parent=15 // pred_region
          %p565 = scmp.lt.s32.totalorder %s39, 1
          %s566 = scalar_select %p565, %s39, 1
          %s567 = scalar_lea.vmem %s12, %s566
        $region68: #{tpu_custom_call.1} parent=15 // pred_fallthru
          _
      $region16: #{tpu_custom_call.1} parent=5 // pred_fallthru
        _
      %p568 = scmp.le.s32.totalorder 1, %s31
      %p569 = scmp.lt.s32.totalorder %s31, 5
      %p570 = pnand %p568, %p569
      %p571 = pneg %p570
      // Predicated region
      $region69: #{tpu_custom_call.1} parent=5 // pred_check
        _
      $region70: #{tpu_custom_call.1} parent=5 // pred_check_branch
        %573 = sbr.rel (%p570) target = $region72
      $region71: #{tpu_custom_call.1} parent=5 // pred_region
        %s574 = ssub.s32 %s31, 1
        %s575 = sand.u32 %s56, 1
        %s576 = scalar_lea.sflag [#allocation5], %s575
        %s577 = sand.u32 %s56, 1
        %s578 = smul.addr %s577, 8
        %s579 = scalar_lea.vmem [#allocation4], %s578
        // Predicated region
        $region73: #{tpu_custom_call.1} parent=71 // pred_check
          %p580 = pneg %p69
        $region74: #{tpu_custom_call.1} parent=71 // pred_check_branch
          %582 = sbr.rel (%p580) target = $region76
        $region75: #{tpu_custom_call.1} parent=71 // pred_region
          %583 = dma.done %s576, 128
        $region76: #{tpu_custom_call.1} parent=71 // pred_fallthru
          _
        %s584 = sand.u32 %s36, 1
        %s585 = scalar_lea.sflag [#allocation8], %s584
        %s586 = sand.u32 %s160, 1
        %s587 = scalar_lea.vmem [#allocation7], %s586
        // Predicated region
        $region77: #{tpu_custom_call.1} parent=71 // pred_check
          %p588 = pneg %p173
        $region78: #{tpu_custom_call.1} parent=71 // pred_check_branch
          %590 = sbr.rel (%p588) target = $region80
        $region79: #{tpu_custom_call.1} parent=71 // pred_region
          %591 = dma.done %s585, 16
        $region80: #{tpu_custom_call.1} parent=71 // pred_fallthru
          _
        %s592 = sand.u32 %s36, 1
        %s593 = scalar_lea.sflag [#allocation8], %s592
        %s594 = sand.u32 %s186, 1
        %s595 = scalar_lea.vmem [#allocation9], %s594
        // Predicated region
        $region81: #{tpu_custom_call.1} parent=71 // pred_check
          %p596 = pneg %p199
        $region82: #{tpu_custom_call.1} parent=71 // pred_check_branch
          %598 = sbr.rel (%p596) target = $region84
        $region83: #{tpu_custom_call.1} parent=71 // pred_region
          %599 = dma.done %s593, 16
        $region84: #{tpu_custom_call.1} parent=71 // pred_fallthru
          _
        %s600 = sand.u32 %s36, 1
        %s601 = scalar_lea.sflag [#allocation11], %s600
        %s602 = sand.u32 %s212, 1
        %s603 = scalar_lea.vmem [#allocation10], %s602
        // Predicated region
        $region85: #{tpu_custom_call.1} parent=71 // pred_check
          %p604 = pneg %p225
        $region86: #{tpu_custom_call.1} parent=71 // pred_check_branch
          %606 = sbr.rel (%p604) target = $region88
        $region87: #{tpu_custom_call.1} parent=71 // pred_region
          %607 = dma.done %s601, 16
        $region88: #{tpu_custom_call.1} parent=71 // pred_fallthru
          _
        %s608 = sand.u32 %s36, 1
        %s609 = scalar_lea.sflag [#allocation11], %s608
        %s610 = sand.u32 %s264, 1
        %s611 = scalar_lea.vmem [#allocation12], %s610
        // Predicated region
        $region89: #{tpu_custom_call.1} parent=71 // pred_check
          %p612 = pneg %p277
        $region90: #{tpu_custom_call.1} parent=71 // pred_check_branch
          %614 = sbr.rel (%p612) target = $region92
        $region91: #{tpu_custom_call.1} parent=71 // pred_region
          %615 = dma.done %s609, 16
        $region92: #{tpu_custom_call.1} parent=71 // pred_fallthru
          _
        %s616 = sand.u32 %s56, 1
        %s617 = scalar_lea.sflag [#allocation5], %s616
        %s618 = sand.u32 %s56, 1
        %s619 = smul.addr %s618, 8
        %s620 = scalar_lea.vmem [#allocation4], %s619
        %p621 = pneg %p69
        %p622 = pneg %p66
        %p623 = scmp.lt.s32.totalorder %s41, 1
        %s624 = scalar_select %p623, %s41, 1
        %s625 = smul.addr %s624, 4
        %s626 = smul.addr %s625, 4
        %s627 = scalar_lea.vmem %s1, %s626
        %p628 = pneg %p95
        %p629 = pneg %p92
        %p630 = scmp.lt.s32.totalorder %s41, 1
        %s631 = scalar_select %p630, %s41, 1
        %s632 = scalar_lea.vmem %s2, %s631
        %p633 = pneg %p121
        %p634 = pneg %p118
        %p635 = scmp.lt.s32.totalorder %s41, 1
        %s636 = scalar_select %p635, %s41, 1
        %s637 = smul.addr %s636, 4
        %s638 = smul.addr %s637, 4
        %s639 = scalar_lea.vmem %s3, %s638
        %p640 = pneg %p147
        %p641 = pneg %p144
        %s642 = sand.u32 %s36, 1
        %s643 = scalar_lea.sflag [#allocation8], %s642
        %s644 = sand.u32 %s160, 1
        %s645 = scalar_lea.vmem [#allocation7], %s644
        %p646 = pneg %p173
        %p647 = pneg %p170
        %s648 = sand.u32 %s36, 1
        %s649 = scalar_lea.sflag [#allocation8], %s648
        %s650 = sand.u32 %s186, 1
        %s651 = scalar_lea.vmem [#allocation9], %s650
        %p652 = pneg %p199
        %p653 = pneg %p196
        %s654 = sand.u32 %s36, 1
        %s655 = scalar_lea.sflag [#allocation11], %s654
        %s656 = sand.u32 %s212, 1
        %s657 = scalar_lea.vmem [#allocation10], %s656
        %p658 = pneg %p225
        %p659 = pneg %p222
        %p660 = scmp.lt.s32.totalorder %s41, 1
        %s661 = scalar_select %p660, %s41, 1
        %s662 = smul.addr %s661, 4
        %s663 = smul.addr %s662, 4
        %s664 = scalar_lea.vmem %s7, %s663
        %p665 = pneg %p251
        %p666 = pneg %p248
        %s667 = sand.u32 %s36, 1
        %s668 = scalar_lea.sflag [#allocation11], %s667
        %s669 = sand.u32 %s264, 1
        %s670 = scalar_lea.vmem [#allocation12], %s669
        %p671 = pneg %p277
        %p672 = pneg %p274
        %p673 = scmp.lt.s32.totalorder %s41, 1
        %s674 = scalar_select %p673, %s41, 1
        %s675 = smul.addr %s674, 8
        %s676 = smul.addr %s675, 4
        %s677 = scalar_lea.vmem %s9, %s676
        %p678 = pneg %p303
        %p679 = pneg %p300
        %p680 = scmp.lt.s32.totalorder %s41, 1
        %s681 = scalar_select %p680, %s41, 1
        %s682 = scalar_lea.vmem %s10, %s681
        %p683 = pneg %p329
        %p684 = pneg %p326
        %p685 = scmp.lt.s32.totalorder %s41, 1
        %s686 = scalar_select %p685, %s41, 1
        %s687 = scalar_lea.vmem %s11, %s686
        %p688 = pneg %p355
        %p689 = pneg %p352
        %p690 = scmp.lt.s32.totalorder %s41, 1
        %s691 = scalar_select %p690, %s41, 1
        %s692 = scalar_lea.vmem %s12, %s691
        %p693 = pneg %p381
        %p694 = pneg %p378
        %p695 = pneg %p407
        %p696 = pneg %p404
        %s697 = sand.u32 %s394, 1
        %s698 = scalar_lea.sflag [#allocation6], %s697
        %s699 = sand.u32 %s394, 1
        %s700 = smul.addr %s699, 8
        %s701 = scalar_lea.vmem [#allocation13], %s700
        %p702 = scmp.lt.s32.totalorder %s41, 1
        %s703 = scalar_select %p702, %s41, 1
        %s704 = smul.addr %s703, 4
        %s705 = smul.addr %s704, 4
        %s706 = scalar_lea.vmem %s1, %s705
        %p707 = scmp.lt.s32.totalorder %s41, 1
        %s708 = scalar_select %p707, %s41, 1
        %s709 = scalar_lea.vmem %s2, %s708
        %p710 = scmp.lt.s32.totalorder %s41, 1
        %s711 = scalar_select %p710, %s41, 1
        %s712 = smul.addr %s711, 4
        %s713 = smul.addr %s712, 4
        %s714 = scalar_lea.vmem %s3, %s713
        %p715 = scmp.lt.s32.totalorder %s41, 1
        %s716 = scalar_select %p715, %s41, 1
        %s717 = smul.addr %s716, 4
        %s718 = smul.addr %s717, 4
        %s719 = scalar_lea.vmem %s7, %s718
        %p720 = scmp.lt.s32.totalorder %s41, 1
        %s721 = scalar_select %p720, %s41, 1
        %s722 = smul.addr %s721, 8
        %s723 = smul.addr %s722, 4
        %s724 = scalar_lea.vmem %s9, %s723
        %p725 = scmp.lt.s32.totalorder %s41, 1
        %s726 = scalar_select %p725, %s41, 1
        %s727 = scalar_lea.vmem %s10, %s726
        %p728 = scmp.lt.s32.totalorder %s41, 1
        %s729 = scalar_select %p728, %s41, 1
        %s730 = scalar_lea.vmem %s11, %s729
        %p731 = scmp.lt.s32.totalorder %s41, 1
        %s732 = scalar_select %p731, %s41, 1
        %s733 = scalar_lea.vmem %s12, %s732
        %p735 = scmp.eq.s32.totalorder %s41, 0
        // Predicated region
        $region93: #{tpu_custom_call.1} parent=71 // pred_check
          %p736 = pneg %p735
        $region94: #{tpu_custom_call.1} parent=71 // pred_check_branch
          %738 = sbr.rel (%p736) target = $region96
        $region95: #{tpu_custom_call.1} parent=71 // pred_region
          %v739 = vld [vmem:[%s579] sm:$0xff]
          %vm740 = vcmask 261120
          %741 = vst.msk [vmem:[#allocation2] sm:$0xff] %vm740, %v739
        $region96: #{tpu_custom_call.1} parent=71 // pred_fallthru
          _
        %v742 = vld [vmem:[#allocation2] sm:$0xff]
        %v743 = vpack.c.bf16 %v742, %v742
        %v744 = vld [vmem:[%s706] sm:$0xf]
        %v745 = vld [vmem:[%s706 + $0x4] sm:$0xf]
        %v746 = vld [vmem:[%s706 + $0x8] sm:$0xf]
        %v747 = vld [vmem:[%s706 + $0xc] sm:$0xf]
        %v748 = vld [vmem:[%s709] sm:$0x1]
        %v750 = vlaneseq
        %v751 = vshrl.u32 %v750, 7
        %v752 = vsub.s32 0, %v751
        %v753 = vrot.slane %v748, %v752
        %v759 = vunpack.c.l.b16 %v744
        %v760 = vunpack.c.l.b16 %v745
        %v761 = vunpack.c.l.b16 %v746
        %v762 = vunpack.c.l.b16 %v747
        %v763 = vpack.c.b16 %v760, %v759
        %v764 = vpack.c.b16 %v762, %v761
        %vm767 = vcmask 261120
        %v769 = vsel %vm767, %v743, 0
        %771 = vmatprep.subr.bf16.mxu0 0
        %772 = vmatpush1.bf16.msra.mxu0 %v763
        %773 = vmatprep.subr.bf16.mxu0 0
        %774 = vmatpush1.bf16.msra.mxu0 %v764
        %775 = vmatprep.subr.bf16.mxu0 0
        %776 = vmatpush1.bf16.msra.mxu0 0
        %777 = vmatprep.subr.bf16.mxu0 0
        %778 = vmatpush1.bf16.msra.mxu0 0
        %779 = vmatprep.subr.bf16.mxu0 0
        %780 = vmatpush1.bf16.msra.mxu0 0
        %781 = vmatprep.subr.bf16.mxu0 0
        %782 = vmatpush1.bf16.msra.mxu0 0
        %783 = vmatprep.subr.bf16.mxu0 0
        %784 = vmatpush1.bf16.msra.mxu0 0
        %785 = vmatprep.subr.bf16.mxu0 0
        %786 = vmatpush1.bf16.msra.mxu0 0
        %787 = vmatprep.subr.bf16.mxu0 0
        %788 = vmatpush1.bf16.msra.mxu0 0
        %789 = vmatprep.subr.bf16.mxu0 0
        %790 = vmatpush1.bf16.msra.mxu0 0
        %791 = vmatprep.subr.bf16.mxu0 0
        %792 = vmatpush1.bf16.msra.mxu0 0
        %793 = vmatprep.subr.bf16.mxu0 0
        %794 = vmatpush1.bf16.msra.mxu0 0
        %795 = vmatprep.subr.bf16.mxu0 0
        %796 = vmatpush1.bf16.msra.mxu0 0
        %797 = vmatprep.subr.bf16.mxu0 0
        %798 = vmatpush1.bf16.msra.mxu0 0
        %799 = vmatprep.subr.bf16.mxu0 0
        %800 = vmatpush1.bf16.msra.mxu0 0
        %801 = vmatprep.subr.bf16.mxu0 0
        %802 = vmatpush1.bf16.msra.mxu0 0
        %803 = vmatprep.mubr.bf16.mxu0 0
        %804 = vmatmul.mubr.bf16.gmra.mrb[0].mxu0 %v769
        %v805 = vpop.f32.mrb[0].mxu0
        %v806 = vadd.f32 %v753, %v805
        %v807 = vpop.f32.mrb[0].mxu0
        %v808 = vpop.f32.mrb[0].mxu0
        %v809 = vpop.f32.mrb[0].mxu0
        %810 = vdwg.mxu0
        %v811 = vpack.c.bf16 %v806, %v806
        %813 = vrot.lane.b32.xlu0 %v811, 96
        %v814 = vpop.permute.xlu0 %813
        %vm815 = vcmask 64512
        %v817 = vsel %vm815, %v811, 0
        %v820 = vsel %vm815, %v814, 0
        %822 = vmatprep.subr.bf16.mxu0 0
        %823 = vmatpush1.bf16.xpose.msra.mxu0 %v820
        %824 = vmatprep.subr.bf16.mxu0 0
        %825 = vmatpush1.bf16.xpose.msra.mxu0 0
        %826 = vmatprep.subr.bf16.mxu0 0
        %827 = vmatpush1.bf16.xpose.msra.mxu0 0
        %828 = vmatprep.subr.bf16.mxu0 0
        %829 = vmatpush1.bf16.xpose.msra.mxu0 0
        %830 = vmatprep.subr.bf16.mxu0 0
        %831 = vmatpush1.bf16.xpose.msra.mxu0 0
        %832 = vmatprep.subr.bf16.mxu0 0
        %833 = vmatpush1.bf16.xpose.msra.mxu0 0
        %834 = vmatprep.subr.bf16.mxu0 0
        %835 = vmatpush1.bf16.xpose.msra.mxu0 0
        %836 = vmatprep.subr.bf16.mxu0 0
        %837 = vmatpush1.bf16.xpose.msra.mxu0 0
        %838 = vmatprep.subr.bf16.mxu0 0
        %839 = vmatpush1.bf16.xpose.msra.mxu0 0
        %840 = vmatprep.subr.bf16.mxu0 0
        %841 = vmatpush1.bf16.xpose.msra.mxu0 0
        %842 = vmatprep.subr.bf16.mxu0 0
        %843 = vmatpush1.bf16.xpose.msra.mxu0 0
        %844 = vmatprep.subr.bf16.mxu0 0
        %845 = vmatpush1.bf16.xpose.msra.mxu0 0
        %846 = vmatprep.subr.bf16.mxu0 0
        %847 = vmatpush1.bf16.xpose.msra.mxu0 0
        %848 = vmatprep.subr.bf16.mxu0 0
        %849 = vmatpush1.bf16.xpose.msra.mxu0 0
        %850 = vmatprep.subr.bf16.mxu0 0
        %851 = vmatpush1.bf16.xpose.msra.mxu0 0
        %852 = vmatprep.subr.bf16.mxu0 0
        %853 = vmatpush1.bf16.xpose.msra.mxu0 0
        %854 = vmatprep.mubr.bf16.mxu0 0
        %855 = vmatmul.mubr.bf16.gmra.mrb[0].mxu0 %v817
        %v856 = vpop.f32.mrb[0].mxu0
        %v857 = vadd.f32 0.0, %v856
        %v858 = vpop.f32.mrb[0].mxu0
        %v859 = vpop.f32.mrb[0].mxu0
        %v860 = vpop.f32.mrb[0].mxu0
        %861 = vdwg.mxu0
        %v862 = vmul.f32 %v857, 0.35355338
        %v863 = vsel %vm815, %v862, -inf
        %864 = vmax.xlane.f32.xlu0 %v863
        %v865 = vpop.xlane.xlu0 %864
        %v866 = vsub.f32 %v862, %v865
        %v867 = vmul.f32 %v866, 1.442695
        %v868 = vpow.pop %v867
        %v869 = vsel %vm815, %v868, 0.0
        %870 = vadd.xlane.f32.xlu0 %v869
        %v871 = vpop.xlane.xlu0 %870
        %v872 = vrcp.pop %v871
        %v873 = vmul.f32 %v868, %v872
        %v874 = vpack.c.bf16 %v873, %v873
        %875 = vrot.lane.b32.xlu0 %v811, 64
        %v876 = vpop.permute.xlu0 %875
        %v878 = vsel %vm815, %v874, 0
        %vm880 = vcmask 1043456
        %v882 = vsel %vm880, %v876, 0
        %884 = vmatprep.subr.bf16.mxu0 0
        %885 = vmatpush1.bf16.msra.mxu0 %v882
        %886 = vmatprep.subr.bf16.mxu0 0
        %887 = vmatpush1.bf16.msra.mxu0 0
        %888 = vmatprep.subr.bf16.mxu0 0
        %889 = vmatpush1.bf16.msra.mxu0 0
        %890 = vmatprep.subr.bf16.mxu0 0
        %891 = vmatpush1.bf16.msra.mxu0 0
        %892 = vmatprep.subr.bf16.mxu0 0
        %893 = vmatpush1.bf16.msra.mxu0 0
        %894 = vmatprep.subr.bf16.mxu0 0
        %895 = vmatpush1.bf16.msra.mxu0 0
        %896 = vmatprep.subr.bf16.mxu0 0
        %897 = vmatpush1.bf16.msra.mxu0 0
        %898 = vmatprep.subr.bf16.mxu0 0
        %899 = vmatpush1.bf16.msra.mxu0 0
        %900 = vmatprep.subr.bf16.mxu0 0
        %901 = vmatpush1.bf16.msra.mxu0 0
        %902 = vmatprep.subr.bf16.mxu0 0
        %903 = vmatpush1.bf16.msra.mxu0 0
        %904 = vmatprep.subr.bf16.mxu0 0
        %905 = vmatpush1.bf16.msra.mxu0 0
        %906 = vmatprep.subr.bf16.mxu0 0
        %907 = vmatpush1.bf16.msra.mxu0 0
        %908 = vmatprep.subr.bf16.mxu0 0
        %909 = vmatpush1.bf16.msra.mxu0 0
        %910 = vmatprep.subr.bf16.mxu0 0
        %911 = vmatpush1.bf16.msra.mxu0 0
        %912 = vmatprep.subr.bf16.mxu0 0
        %913 = vmatpush1.bf16.msra.mxu0 0
        %914 = vmatprep.subr.bf16.mxu0 0
        %915 = vmatpush1.bf16.msra.mxu0 0
        %916 = vmatprep.mubr.bf16.mxu0 0
        %917 = vmatmul.mubr.bf16.gmra.mrb[0].mxu0 %v878
        %v918 = vpop.f32.mrb[0].mxu0
        %v919 = vadd.f32 0.0, %v918
        %v920 = vpop.f32.mrb[0].mxu0
        %v921 = vpop.f32.mrb[0].mxu0
        %v922 = vpop.f32.mrb[0].mxu0
        %923 = vdwg.mxu0
        %924 = vst.msk [vmem:[#allocation3] sm:$0xff] %vm815, %v919
        %925 = vrot.lane.b32.xlu0 %v811, 120
        %v926 = vpop.permute.xlu0 %925
        %927 = vrot.lane.b32.xlu0 %v811, 88
        %v928 = vpop.permute.xlu0 %927
        %v930 = vsel %vm815, %v926, 0
        %v933 = vsel %vm815, %v928, 0
        %935 = vmatprep.subr.bf16.mxu0 0
        %936 = vmatpush1.bf16.xpose.msra.mxu0 %v933
        %937 = vmatprep.subr.bf16.mxu0 0
        %938 = vmatpush1.bf16.xpose.msra.mxu0 0
        %939 = vmatprep.subr.bf16.mxu0 0
        %940 = vmatpush1.bf16.xpose.msra.mxu0 0
        %941 = vmatprep.subr.bf16.mxu0 0
        %942 = vmatpush1.bf16.xpose.msra.mxu0 0
        %943 = vmatprep.subr.bf16.mxu0 0
        %944 = vmatpush1.bf16.xpose.msra.mxu0 0
        %945 = vmatprep.subr.bf16.mxu0 0
        %946 = vmatpush1.bf16.xpose.msra.mxu0 0
        %947 = vmatprep.subr.bf16.mxu0 0
        %948 = vmatpush1.bf16.xpose.msra.mxu0 0
        %949 = vmatprep.subr.bf16.mxu0 0
        %950 = vmatpush1.bf16.xpose.msra.mxu0 0
        %951 = vmatprep.subr.bf16.mxu0 0
        %952 = vmatpush1.bf16.xpose.msra.mxu0 0
        %953 = vmatprep.subr.bf16.mxu0 0
        %954 = vmatpush1.bf16.xpose.msra.mxu0 0
        %955 = vmatprep.subr.bf16.mxu0 0
        %956 = vmatpush1.bf16.xpose.msra.mxu0 0
        %957 = vmatprep.subr.bf16.mxu0 0
        %958 = vmatpush1.bf16.xpose.msra.mxu0 0
        %959 = vmatprep.subr.bf16.mxu0 0
        %960 = vmatpush1.bf16.xpose.msra.mxu0 0
        %961 = vmatprep.subr.bf16.mxu0 0
        %962 = vmatpush1.bf16.xpose.msra.mxu0 0
        %963 = vmatprep.subr.bf16.mxu0 0
        %964 = vmatpush1.bf16.xpose.msra.mxu0 0
        %965 = vmatprep.subr.bf16.mxu0 0
        %966 = vmatpush1.bf16.xpose.msra.mxu0 0
        %967 = vmatprep.mubr.bf16.mxu0 0
        %968 = vmatmul.mubr.bf16.gmra.mrb[0].mxu0 %v930
        %v969 = vpop.f32.mrb[0].mxu0
        %v970 = vadd.f32 0.0, %v969
        %v971 = vpop.f32.mrb[0].mxu0
        %v972 = vpop.f32.mrb[0].mxu0
        %v973 = vpop.f32.mrb[0].mxu0
        %974 = vdwg.mxu0
        %v975 = vmul.f32 %v970, 0.35355338
        %v976 = vsel %vm815, %v975, -inf
        %977 = vmax.xlane.f32.xlu0 %v976
        %v978 = vpop.xlane.xlu0 %977
        %v979 = vsub.f32 %v975, %v978
        %v980 = vmul.f32 %v979, 1.442695
        %v981 = vpow.pop %v980
        %v982 = vsel %vm815, %v981, 0.0
        %983 = vadd.xlane.f32.xlu0 %v982
        %v984 = vpop.xlane.xlu0 %983
        %v985 = vrcp.pop %v984
        %v986 = vmul.f32 %v981, %v985
        %v987 = vpack.c.bf16 %v986, %v986
        %988 = vrot.lane.b32.xlu0 %v811, 56
        %v989 = vpop.permute.xlu0 %988
        %v991 = vsel %vm815, %v987, 0
        %v994 = vsel %vm880, %v989, 0
        %996 = vmatprep.subr.bf16.mxu0 0
        %997 = vmatpush1.bf16.msra.mxu0 %v994
        %998 = vmatprep.subr.bf16.mxu0 0
        %999 = vmatpush1.bf16.msra.mxu0 0
        %1000 = vmatprep.subr.bf16.mxu0 0
        %1001 = vmatpush1.bf16.msra.mxu0 0
        %1002 = vmatprep.subr.bf16.mxu0 0
        %1003 = vmatpush1.bf16.msra.mxu0 0
        %1004 = vmatprep.subr.bf16.mxu0 0
        %1005 = vmatpush1.bf16.msra.mxu0 0
        %1006 = vmatprep.subr.bf16.mxu0 0
        %1007 = vmatpush1.bf16.msra.mxu0 0
        %1008 = vmatprep.subr.bf16.mxu0 0
        %1009 = vmatpush1.bf16.msra.mxu0 0
        %1010 = vmatprep.subr.bf16.mxu0 0
        %1011 = vmatpush1.bf16.msra.mxu0 0
        %1012 = vmatprep.subr.bf16.mxu0 0
        %1013 = vmatpush1.bf16.msra.mxu0 0
        %1014 = vmatprep.subr.bf16.mxu0 0
        %1015 = vmatpush1.bf16.msra.mxu0 0
        %1016 = vmatprep.subr.bf16.mxu0 0
        %1017 = vmatpush1.bf16.msra.mxu0 0
        %1018 = vmatprep.subr.bf16.mxu0 0
        %1019 = vmatpush1.bf16.msra.mxu0 0
        %1020 = vmatprep.subr.bf16.mxu0 0
        %1021 = vmatpush1.bf16.msra.mxu0 0
        %1022 = vmatprep.subr.bf16.mxu0 0
        %1023 = vmatpush1.bf16.msra.mxu0 0
        %1024 = vmatprep.subr.bf16.mxu0 0
        %1025 = vmatpush1.bf16.msra.mxu0 0
        %1026 = vmatprep.subr.bf16.mxu0 0
        %1027 = vmatpush1.bf16.msra.mxu0 0
        %1028 = vmatprep.mubr.bf16.mxu0 0
        %1029 = vmatmul.mubr.bf16.gmra.mrb[0].mxu0 %v991
        %v1030 = vpop.f32.mrb[0].mxu0
        %v1031 = vadd.f32 0.0, %v1030
        %v1032 = vpop.f32.mrb[0].mxu0
        %v1033 = vpop.f32.mrb[0].mxu0
        %v1034 = vpop.f32.mrb[0].mxu0
        %1035 = vdwg.mxu0
        %1037 = vrot.lane.b32.xlu0 %v1031, 8
        %v1038 = vpop.permute.xlu0 %1037
        %vm1040 = vcmask 130112
        %1041 = vst.msk [vmem:[#allocation3] sm:$0xff] %vm1040, %v1038
        %1042 = vrot.lane.b32.xlu0 %v811, 112
        %v1043 = vpop.permute.xlu0 %1042
        %1044 = vrot.lane.b32.xlu0 %v811, 80
        %v1045 = vpop.permute.xlu0 %1044
        %v1047 = vsel %vm815, %v1043, 0
        %v1050 = vsel %vm815, %v1045, 0
        %1052 = vmatprep.subr.bf16.mxu0 0
        %1053 = vmatpush1.bf16.xpose.msra.mxu0 %v1050
        %1054 = vmatprep.subr.bf16.mxu0 0
        %1055 = vmatpush1.bf16.xpose.msra.mxu0 0
        %1056 = vmatprep.subr.bf16.mxu0 0
        %1057 = vmatpush1.bf16.xpose.msra.mxu0 0
        %1058 = vmatprep.subr.bf16.mxu0 0
        %1059 = vmatpush1.bf16.xpose.msra.mxu0 0
        %1060 = vmatprep.subr.bf16.mxu0 0
        %1061 = vmatpush1.bf16.xpose.msra.mxu0 0
        %1062 = vmatprep.subr.bf16.mxu0 0
        %1063 = vmatpush1.bf16.xpose.msra.mxu0 0
        %1064 = vmatprep.subr.bf16.mxu0 0
        %1065 = vmatpush1.bf16.xpose.msra.mxu0 0
        %1066 = vmatprep.subr.bf16.mxu0 0
        %1067 = vmatpush1.bf16.xpose.msra.mxu0 0
        %1068 = vmatprep.subr.bf16.mxu0 0
        %1069 = vmatpush1.bf16.xpose.msra.mxu0 0
        %1070 = vmatprep.subr.bf16.mxu0 0
        %1071 = vmatpush1.bf16.xpose.msra.mxu0 0
        %1072 = vmatprep.subr.bf16.mxu0 0
        %1073 = vmatpush1.bf16.xpose.msra.mxu0 0
        %1074 = vmatprep.subr.bf16.mxu0 0
        %1075 = vmatpush1.bf16.xpose.msra.mxu0 0
        %1076 = vmatprep.subr.bf16.mxu0 0
        %1077 = vmatpush1.bf16.xpose.msra.mxu0 0
        %1078 = vmatprep.subr.bf16.mxu0 0
        %1079 = vmatpush1.bf16.xpose.msra.mxu0 0
        %1080 = vmatprep.subr.bf16.mxu0 0
        %1081 = vmatpush1.bf16.xpose.msra.mxu0 0
        %1082 = vmatprep.subr.bf16.mxu0 0
        %1083 = vmatpush1.bf16.xpose.msra.mxu0 0
        %1084 = vmatprep.mubr.bf16.mxu0 0
        %1085 = vmatmul.mubr.bf16.gmra.mrb[0].mxu0 %v1047
        %v1086 = vpop.f32.mrb[0].mxu0
        %v1087 = vadd.f32 0.0, %v1086
        %v1088 = vpop.f32.mrb[0].mxu0
        %v1089 = vpop.f32.mrb[0].mxu0
        %v1090 = vpop.f32.mrb[0].mxu0
        %1091 = vdwg.mxu0
        %v1092 = vmul.f32 %v1087, 0.35355338
        %v1093 = vsel %vm815, %v1092, -inf
        %1094 = vmax.xlane.f32.xlu0 %v1093
        %v1095 = vpop.xlane.xlu0 %1094
        %v1096 = vsub.f32 %v1092, %v1095
        %v1097 = vmul.f32 %v1096, 1.442695
        %v1098 = vpow.pop %v1097
        %v1099 = vsel %vm815, %v1098, 0.0
        %1100 = vadd.xlane.f32.xlu0 %v1099
        %v1101 = vpop.xlane.xlu0 %1100
        %v1102 = vrcp.pop %v1101
        %v1103 = vmul.f32 %v1098, %v1102
        %v1104 = vpack.c.bf16 %v1103, %v1103
        %1105 = vrot.lane.b32.xlu0 %v811, 48
        %v1106 = vpop.permute.xlu0 %1105
        %v1108 = vsel %vm815, %v1104, 0
        %v1111 = vsel %vm880, %v1106, 0
        %1113 = vmatprep.subr.bf16.mxu0 0
        %1114 = vmatpush1.bf16.msra.mxu0 %v1111
        %1115 = vmatprep.subr.bf16.mxu0 0
        %1116 = vmatpush1.bf16.msra.mxu0 0
        %1117 = vmatprep.subr.bf16.mxu0 0
        %1118 = vmatpush1.bf16.msra.mxu0 0
        %1119 = vmatprep.subr.bf16.mxu0 0
        %1120 = vmatpush1.bf16.msra.mxu0 0
        %1121 = vmatprep.subr.bf16.mxu0 0
        %1122 = vmatpush1.bf16.msra.mxu0 0
        %1123 = vmatprep.subr.bf16.mxu0 0
        %1124 = vmatpush1.bf16.msra.mxu0 0
        %1125 = vmatprep.subr.bf16.mxu0 0
        %1126 = vmatpush1.bf16.msra.mxu0 0
        %1127 = vmatprep.subr.bf16.mxu0 0
        %1128 = vmatpush1.bf16.msra.mxu0 0
        %1129 = vmatprep.subr.bf16.mxu0 0
        %1130 = vmatpush1.bf16.msra.mxu0 0
        %1131 = vmatprep.subr.bf16.mxu0 0
        %1132 = vmatpush1.bf16.msra.mxu0 0
        %1133 = vmatprep.subr.bf16.mxu0 0
        %1134 = vmatpush1.bf16.msra.mxu0 0
        %1135 = vmatprep.subr.bf16.mxu0 0
        %1136 = vmatpush1.bf16.msra.mxu0 0
        %1137 = vmatprep.subr.bf16.mxu0 0
        %1138 = vmatpush1.bf16.msra.mxu0 0
        %1139 = vmatprep.subr.bf16.mxu0 0
        %1140 = vmatpush1.bf16.msra.mxu0 0
        %1141 = vmatprep.subr.bf16.mxu0 0
        %1142 = vmatpush1.bf16.msra.mxu0 0
        %1143 = vmatprep.subr.bf16.mxu0 0
        %1144 = vmatpush1.bf16.msra.mxu0 0
        %1145 = vmatprep.mubr.bf16.mxu0 0
        %1146 = vmatmul.mubr.bf16.gmra.mrb[0].mxu0 %v1108
        %v1147 = vpop.f32.mrb[0].mxu0
        %v1148 = vadd.f32 0.0, %v1147
        %v1149 = vpop.f32.mrb[0].mxu0
        %v1150 = vpop.f32.mrb[0].mxu0
        %v1151 = vpop.f32.mrb[0].mxu0
        %1152 = vdwg.mxu0
        %1154 = vrot.lane.b32.xlu0 %v1148, 16
        %v1155 = vpop.permute.xlu0 %1154
        %vm1157 = vcmask 195712
        %1158 = vst.msk [vmem:[#allocation3] sm:$0xff] %vm1157, %v1155
        %1159 = vrot.lane.b32.xlu0 %v811, 104
        %v1160 = vpop.permute.xlu0 %1159
        %1161 = vrot.lane.b32.xlu0 %v811, 72
        %v1162 = vpop.permute.xlu0 %1161
        %v1164 = vsel %vm815, %v1160, 0
        %v1167 = vsel %vm815, %v1162, 0
        %1169 = vmatprep.subr.bf16.mxu0 0
        %1170 = vmatpush1.bf16.xpose.msra.mxu0 %v1167
        %1171 = vmatprep.subr.bf16.mxu0 0
        %1172 = vmatpush1.bf16.xpose.msra.mxu0 0
        %1173 = vmatprep.subr.bf16.mxu0 0
        %1174 = vmatpush1.bf16.xpose.msra.mxu0 0
        %1175 = vmatprep.subr.bf16.mxu0 0
        %1176 = vmatpush1.bf16.xpose.msra.mxu0 0
        %1177 = vmatprep.subr.bf16.mxu0 0
        %1178 = vmatpush1.bf16.xpose.msra.mxu0 0
        %1179 = vmatprep.subr.bf16.mxu0 0
        %1180 = vmatpush1.bf16.xpose.msra.mxu0 0
        %1181 = vmatprep.subr.bf16.mxu0 0
        %1182 = vmatpush1.bf16.xpose.msra.mxu0 0
        %1183 = vmatprep.subr.bf16.mxu0 0
        %1184 = vmatpush1.bf16.xpose.msra.mxu0 0
        %1185 = vmatprep.subr.bf16.mxu0 0
        %1186 = vmatpush1.bf16.xpose.msra.mxu0 0
        %1187 = vmatprep.subr.bf16.mxu0 0
        %1188 = vmatpush1.bf16.xpose.msra.mxu0 0
        %1189 = vmatprep.subr.bf16.mxu0 0
        %1190 = vmatpush1.bf16.xpose.msra.mxu0 0
        %1191 = vmatprep.subr.bf16.mxu0 0
        %1192 = vmatpush1.bf16.xpose.msra.mxu0 0
        %1193 = vmatprep.subr.bf16.mxu0 0
        %1194 = vmatpush1.bf16.xpose.msra.mxu0 0
        %1195 = vmatprep.subr.bf16.mxu0 0
        %1196 = vmatpush1.bf16.xpose.msra.mxu0 0
        %1197 = vmatprep.subr.bf16.mxu0 0
        %1198 = vmatpush1.bf16.xpose.msra.mxu0 0
        %1199 = vmatprep.subr.bf16.mxu0 0
        %1200 = vmatpush1.bf16.xpose.msra.mxu0 0
        %1201 = vmatprep.mubr.bf16.mxu0 0
        %1202 = vmatmul.mubr.bf16.gmra.mrb[0].mxu0 %v1164
        %v1203 = vpop.f32.mrb[0].mxu0
        %v1204 = vadd.f32 0.0, %v1203
        %v1205 = vpop.f32.mrb[0].mxu0
        %v1206 = vpop.f32.mrb[0].mxu0
        %v1207 = vpop.f32.mrb[0].mxu0
        %1208 = vdwg.mxu0
        %v1209 = vmul.f32 %v1204, 0.35355338
        %v1210 = vsel %vm815, %v1209, -inf
        %1211 = vmax.xlane.f32.xlu0 %v1210
        %v1212 = vpop.xlane.xlu0 %1211
        %v1213 = vsub.f32 %v1209, %v1212
        %v1214 = vmul.f32 %v1213, 1.442695
        %v1215 = vpow.pop %v1214
        %v1216 = vsel %vm815, %v1215, 0.0
        %1217 = vadd.xlane.f32.xlu0 %v1216
        %v1218 = vpop.xlane.xlu0 %1217
        %v1219 = vrcp.pop %v1218
        %v1220 = vmul.f32 %v1215, %v1219
        %v1221 = vpack.c.bf16 %v1220, %v1220
        %1222 = vrot.lane.b32.xlu0 %v811, 40
        %v1223 = vpop.permute.xlu0 %1222
        %v1225 = vsel %vm815, %v1221, 0
        %v1228 = vsel %vm880, %v1223, 0
        %1230 = vmatprep.subr.bf16.mxu0 0
        %1231 = vmatpush1.bf16.msra.mxu0 %v1228
        %1232 = vmatprep.subr.bf16.mxu0 0
        %1233 = vmatpush1.bf16.msra.mxu0 0
        %1234 = vmatprep.subr.bf16.mxu0 0
        %1235 = vmatpush1.bf16.msra.mxu0 0
        %1236 = vmatprep.subr.bf16.mxu0 0
        %1237 = vmatpush1.bf16.msra.mxu0 0
        %1238 = vmatprep.subr.bf16.mxu0 0
        %1239 = vmatpush1.bf16.msra.mxu0 0
        %1240 = vmatprep.subr.bf16.mxu0 0
        %1241 = vmatpush1.bf16.msra.mxu0 0
        %1242 = vmatprep.subr.bf16.mxu0 0
        %1243 = vmatpush1.bf16.msra.mxu0 0
        %1244 = vmatprep.subr.bf16.mxu0 0
        %1245 = vmatpush1.bf16.msra.mxu0 0
        %1246 = vmatprep.subr.bf16.mxu0 0
        %1247 = vmatpush1.bf16.msra.mxu0 0
        %1248 = vmatprep.subr.bf16.mxu0 0
        %1249 = vmatpush1.bf16.msra.mxu0 0
        %1250 = vmatprep.subr.bf16.mxu0 0
        %1251 = vmatpush1.bf16.msra.mxu0 0
        %1252 = vmatprep.subr.bf16.mxu0 0
        %1253 = vmatpush1.bf16.msra.mxu0 0
        %1254 = vmatprep.subr.bf16.mxu0 0
        %1255 = vmatpush1.bf16.msra.mxu0 0
        %1256 = vmatprep.subr.bf16.mxu0 0
        %1257 = vmatpush1.bf16.msra.mxu0 0
        %1258 = vmatprep.subr.bf16.mxu0 0
        %1259 = vmatpush1.bf16.msra.mxu0 0
        %1260 = vmatprep.subr.bf16.mxu0 0
        %1261 = vmatpush1.bf16.msra.mxu0 0
        %1262 = vmatprep.mubr.bf16.mxu0 0
        %1263 = vmatmul.mubr.bf16.gmra.mrb[0].mxu0 %v1225
        %v1264 = vpop.f32.mrb[0].mxu0
        %v1265 = vadd.f32 0.0, %v1264
        %v1266 = vpop.f32.mrb[0].mxu0
        %v1267 = vpop.f32.mrb[0].mxu0
        %v1268 = vpop.f32.mrb[0].mxu0
        %1269 = vdwg.mxu0
        %1271 = vrot.lane.b32.xlu0 %v1265, 24
        %v1272 = vpop.permute.xlu0 %1271
        %vm1274 = vcmask 261312
        %1275 = vst.msk [vmem:[#allocation3] sm:$0xff] %vm1274, %v1272
        %v1276 = vld [vmem:[#allocation3] sm:$0xff]
        %v1277 = vpack.c.bf16 %v1276, %v1276
        %v1278 = vld [vmem:[%s714] sm:$0xf]
        %v1279 = vld [vmem:[%s714 + $0x4] sm:$0xf]
        %v1280 = vld [vmem:[%s714 + $0x8] sm:$0xf]
        %v1281 = vld [vmem:[%s714 + $0xc] sm:$0xf]
        %v1282 = vld [vmem:[%s587] sm:$0x1]
        %v1284 = vlaneseq
        %v1285 = vshrl.u32 %v1284, 7
        %v1286 = vsub.s32 0, %v1285
        %v1287 = vrot.slane %v1282, %v1286
        %v1293 = vunpack.c.l.b16 %v1278
        %v1294 = vunpack.c.l.b16 %v1279
        %v1295 = vunpack.c.l.b16 %v1280
        %v1296 = vunpack.c.l.b16 %v1281
        %v1297 = vpack.c.b16 %v1294, %v1293
        %v1298 = vpack.c.b16 %v1296, %v1295
        %v1302 = vsel %vm767, %v1277, 0
        %1304 = vmatprep.subr.bf16.mxu0 0
        %1305 = vmatpush1.bf16.msra.mxu0 %v1297
        %1306 = vmatprep.subr.bf16.mxu0 0
        %1307 = vmatpush1.bf16.msra.mxu0 %v1298
        %1308 = vmatprep.subr.bf16.mxu0 0
        %1309 = vmatpush1.bf16.msra.mxu0 0
        %1310 = vmatprep.subr.bf16.mxu0 0
        %1311 = vmatpush1.bf16.msra.mxu0 0
        %1312 = vmatprep.subr.bf16.mxu0 0
        %1313 = vmatpush1.bf16.msra.mxu0 0
        %1314 = vmatprep.subr.bf16.mxu0 0
        %1315 = vmatpush1.bf16.msra.mxu0 0
        %1316 = vmatprep.subr.bf16.mxu0 0
        %1317 = vmatpush1.bf16.msra.mxu0 0
        %1318 = vmatprep.subr.bf16.mxu0 0
        %1319 = vmatpush1.bf16.msra.mxu0 0
        %1320 = vmatprep.subr.bf16.mxu0 0
        %1321 = vmatpush1.bf16.msra.mxu0 0
        %1322 = vmatprep.subr.bf16.mxu0 0
        %1323 = vmatpush1.bf16.msra.mxu0 0
        %1324 = vmatprep.subr.bf16.mxu0 0
        %1325 = vmatpush1.bf16.msra.mxu0 0
        %1326 = vmatprep.subr.bf16.mxu0 0
        %1327 = vmatpush1.bf16.msra.mxu0 0
        %1328 = vmatprep.subr.bf16.mxu0 0
        %1329 = vmatpush1.bf16.msra.mxu0 0
        %1330 = vmatprep.subr.bf16.mxu0 0
        %1331 = vmatpush1.bf16.msra.mxu0 0
        %1332 = vmatprep.subr.bf16.mxu0 0
        %1333 = vmatpush1.bf16.msra.mxu0 0
        %1334 = vmatprep.subr.bf16.mxu0 0
        %1335 = vmatpush1.bf16.msra.mxu0 0
        %1336 = vmatprep.mubr.bf16.mxu0 0
        %1337 = vmatmul.mubr.bf16.gmra.mrb[0].mxu0 %v1302
        %v1338 = vpop.f32.mrb[0].mxu0
        %v1339 = vadd.f32 %v1287, %v1338
        %v1340 = vpop.f32.mrb[0].mxu0
        %v1341 = vpop.f32.mrb[0].mxu0
        %v1342 = vpop.f32.mrb[0].mxu0
        %1343 = vdwg.mxu0
        %v1344 = vadd.f32 %v742, %v1339
        %v1345 = vld [vmem:[%s595] sm:$0x1]
        %v1346 = vld [vmem:[%s603] sm:$0x1]
        %v1347 = vsel %vm767, %v1344, 0.0
        %1348 = vadd.xlane.f32.xlu0 %v1347
        %v1349 = vpop.xlane.xlu0 %1348
        %v1350 = vrcp.pop 32.0
        %v1351 = vmul.f32 %v1349, %v1350
        %v1352 = vsub.f32 %v1344, %v1351
        %v1353 = vmul.f32 %v1352, %v1352
        %v1354 = vsel %vm767, %v1353, 0.0
        %1355 = vadd.xlane.f32.xlu0 %v1354
        %v1356 = vpop.xlane.xlu0 %1355
        %v1357 = vmul.f32 %v1356, %v1350
        %v1358 = vadd.f32 %v1357, 1e-05
        %v1359 = vrsqrt.pop %v1358
        %v1360 = vmul.f32 %v1352, %v1359
        %v1362 = vlaneseq
        %v1363 = vshrl.u32 %v1362, 7
        %v1364 = vsub.s32 0, %v1363
        %v1365 = vrot.slane %v1345, %v1364
        %v1367 = vmul.f32 %v1360, %v1365
        %v1369 = vlaneseq
        %v1370 = vshrl.u32 %v1369, 7
        %v1371 = vsub.s32 0, %v1370
        %v1372 = vrot.slane %v1346, %v1371
        %v1374 = vadd.f32 %v1367, %v1372
        %v1375 = vpack.c.bf16 %v1374, %v1374
        %v1376 = vld [vmem:[%s719] sm:$0xf]
        %v1377 = vld [vmem:[%s719 + $0x4] sm:$0xf]
        %v1378 = vld [vmem:[%s719 + $0x8] sm:$0xf]
        %v1379 = vld [vmem:[%s719 + $0xc] sm:$0xf]
        %v1380 = vld [vmem:[%s611] sm:$0x1]
        %v1382 = vlaneseq
        %v1383 = vshrl.u32 %v1382, 7
        %v1384 = vsub.s32 0, %v1383
        %v1385 = vrot.slane %v1380, %v1384
        %v1391 = vunpack.c.l.b16 %v1376
        %v1392 = vunpack.c.l.b16 %v1377
        %v1393 = vunpack.c.l.b16 %v1378
        %v1394 = vunpack.c.l.b16 %v1379
        %v1395 = vpack.c.b16 %v1392, %v1391
        %v1396 = vpack.c.b16 %v1394, %v1393
        %v1400 = vsel %vm767, %v1375, 0
        %1402 = vmatprep.subr.bf16.mxu0 0
        %1403 = vmatpush1.bf16.msra.mxu0 %v1395
        %1404 = vmatprep.subr.bf16.mxu0 0
        %1405 = vmatpush1.bf16.msra.mxu0 %v1396
        %1406 = vmatprep.subr.bf16.mxu0 0
        %1407 = vmatpush1.bf16.msra.mxu0 0
        %1408 = vmatprep.subr.bf16.mxu0 0
        %1409 = vmatpush1.bf16.msra.mxu0 0
        %1410 = vmatprep.subr.bf16.mxu0 0
        %1411 = vmatpush1.bf16.msra.mxu0 0
        %1412 = vmatprep.subr.bf16.mxu0 0
        %1413 = vmatpush1.bf16.msra.mxu0 0
        %1414 = vmatprep.subr.bf16.mxu0 0
        %1415 = vmatpush1.bf16.msra.mxu0 0
        %1416 = vmatprep.subr.bf16.mxu0 0
        %1417 = vmatpush1.bf16.msra.mxu0 0
        %1418 = vmatprep.subr.bf16.mxu0 0
        %1419 = vmatpush1.bf16.msra.mxu0 0
        %1420 = vmatprep.subr.bf16.mxu0 0
        %1421 = vmatpush1.bf16.msra.mxu0 0
        %1422 = vmatprep.subr.bf16.mxu0 0
        %1423 = vmatpush1.bf16.msra.mxu0 0
        %1424 = vmatprep.subr.bf16.mxu0 0
        %1425 = vmatpush1.bf16.msra.mxu0 0
        %1426 = vmatprep.subr.bf16.mxu0 0
        %1427 = vmatpush1.bf16.msra.mxu0 0
        %1428 = vmatprep.subr.bf16.mxu0 0
        %1429 = vmatpush1.bf16.msra.mxu0 0
        %1430 = vmatprep.subr.bf16.mxu0 0
        %1431 = vmatpush1.bf16.msra.mxu0 0
        %1432 = vmatprep.subr.bf16.mxu0 0
        %1433 = vmatpush1.bf16.msra.mxu0 0
        %1434 = vmatprep.mubr.bf16.mxu0 0
        %1435 = vmatmul.mubr.bf16.gmra.mrb[0].mxu0 %v1400
        %v1436 = vpop.f32.mrb[0].mxu0
        %v1437 = vadd.f32 %v1385, %v1436
        %v1438 = vpop.f32.mrb[0].mxu0
        %v1439 = vpop.f32.mrb[0].mxu0
        %v1440 = vpop.f32.mrb[0].mxu0
        %1441 = vdwg.mxu0
        %v1442 = vmax.f32 %v1437, 0.0
        %v1443 = vpack.c.bf16 %v1442, %v1442
        %v1444 = vld [vmem:[%s724] sm:$0xf]
        %v1445 = vld [vmem:[%s724 + $0x4] sm:$0xf]
        %v1446 = vld [vmem:[%s724 + $0x8] sm:$0xf]
        %v1447 = vld [vmem:[%s724 + $0xc] sm:$0xf]
        %v1448 = vld [vmem:[%s724 + $0x10] sm:$0xf]
        %v1449 = vld [vmem:[%s724 + $0x14] sm:$0xf]
        %v1450 = vld [vmem:[%s724 + $0x18] sm:$0xf]
        %v1451 = vld [vmem:[%s724 + $0x1c] sm:$0xf]
        %v1452 = vld [vmem:[%s727] sm:$0x1]
        %v1454 = vlaneseq
        %v1455 = vshrl.u32 %v1454, 7
        %v1456 = vsub.s32 0, %v1455
        %v1457 = vrot.slane %v1452, %v1456
        %v1467 = vunpack.c.l.b16 %v1444
        %v1468 = vunpack.c.l.b16 %v1445
        %v1469 = vunpack.c.l.b16 %v1446
        %v1470 = vunpack.c.l.b16 %v1447
        %v1471 = vunpack.c.l.b16 %v1448
        %v1472 = vunpack.c.l.b16 %v1449
        %v1473 = vunpack.c.l.b16 %v1450
        %v1474 = vunpack.c.l.b16 %v1451
        %v1475 = vpack.c.b16 %v1468, %v1467
        %v1476 = vpack.c.b16 %v1470, %v1469
        %v1477 = vpack.c.b16 %v1472, %v1471
        %v1478 = vpack.c.b16 %v1474, %v1473
        %vm1483 = vcmask 523264
        %v1485 = vsel %vm1483, %v1443, 0
        %1487 = vmatprep.subr.bf16.mxu0 0
        %1488 = vmatpush1.bf16.msra.mxu0 %v1475
        %1489 = vmatprep.subr.bf16.mxu0 0
        %1490 = vmatpush1.bf16.msra.mxu0 %v1476
        %1491 = vmatprep.subr.bf16.mxu0 0
        %1492 = vmatpush1.bf16.msra.mxu0 %v1477
        %1493 = vmatprep.subr.bf16.mxu0 0
        %1494 = vmatpush1.bf16.msra.mxu0 %v1478
        %1495 = vmatprep.subr.bf16.mxu0 0
        %1496 = vmatpush1.bf16.msra.mxu0 0
        %1497 = vmatprep.subr.bf16.mxu0 0
        %1498 = vmatpush1.bf16.msra.mxu0 0
        %1499 = vmatprep.subr.bf16.mxu0 0
        %1500 = vmatpush1.bf16.msra.mxu0 0
        %1501 = vmatprep.subr.bf16.mxu0 0
        %1502 = vmatpush1.bf16.msra.mxu0 0
        %1503 = vmatprep.subr.bf16.mxu0 0
        %1504 = vmatpush1.bf16.msra.mxu0 0
        %1505 = vmatprep.subr.bf16.mxu0 0
        %1506 = vmatpush1.bf16.msra.mxu0 0
        %1507 = vmatprep.subr.bf16.mxu0 0
        %1508 = vmatpush1.bf16.msra.mxu0 0
        %1509 = vmatprep.subr.bf16.mxu0 0
        %1510 = vmatpush1.bf16.msra.mxu0 0
        %1511 = vmatprep.subr.bf16.mxu0 0
        %1512 = vmatpush1.bf16.msra.mxu0 0
        %1513 = vmatprep.subr.bf16.mxu0 0
        %1514 = vmatpush1.bf16.msra.mxu0 0
        %1515 = vmatprep.subr.bf16.mxu0 0
        %1516 = vmatpush1.bf16.msra.mxu0 0
        %1517 = vmatprep.subr.bf16.mxu0 0
        %1518 = vmatpush1.bf16.msra.mxu0 0
        %1519 = vmatprep.mubr.bf16.mxu0 0
        %1520 = vmatmul.mubr.bf16.gmra.mrb[0].mxu0 %v1485
        %v1521 = vpop.f32.mrb[0].mxu0
        %v1522 = vadd.f32 %v1457, %v1521
        %v1523 = vpop.f32.mrb[0].mxu0
        %v1524 = vpop.f32.mrb[0].mxu0
        %v1525 = vpop.f32.mrb[0].mxu0
        %1526 = vdwg.mxu0
        %v1527 = vadd.f32 %v1374, %v1522
        %v1528 = vld [vmem:[%s730] sm:$0x1]
        %v1529 = vld [vmem:[%s733] sm:$0x1]
        %v1530 = vsel %vm767, %v1527, 0.0
        %1531 = vadd.xlane.f32.xlu0 %v1530
        %v1532 = vpop.xlane.xlu0 %1531
        %v1533 = vmul.f32 %v1532, %v1350
        %v1534 = vsub.f32 %v1527, %v1533
        %v1535 = vmul.f32 %v1534, %v1534
        %v1536 = vsel %vm767, %v1535, 0.0
        %1537 = vadd.xlane.f32.xlu0 %v1536
        %v1538 = vpop.xlane.xlu0 %1537
        %v1539 = vmul.f32 %v1538, %v1350
        %v1540 = vadd.f32 %v1539, 1e-05
        %v1541 = vrsqrt.pop %v1540
        %v1542 = vmul.f32 %v1534, %v1541
        %v1544 = vlaneseq
        %v1545 = vshrl.u32 %v1544, 7
        %v1546 = vsub.s32 0, %v1545
        %v1547 = vrot.slane %v1528, %v1546
        %v1549 = vmul.f32 %v1542, %v1547
        %v1551 = vlaneseq
        %v1552 = vshrl.u32 %v1551, 7
        %v1553 = vsub.s32 0, %v1552
        %v1554 = vrot.slane %v1529, %v1553
        %v1556 = vadd.f32 %v1549, %v1554
        %1557 = vst.msk [vmem:[#allocation2] sm:$0xff] %vm767, %v1556
        %1558 = vst.msk [vmem:[%s701] sm:$0xff] %vm767, %v1556
        %s1559 = sand.u32 %s394, 1
        %s1560 = scalar_lea.sflag [#allocation6], %s1559
        %s1561 = sand.u32 %s394, 1
        %s1562 = smul.addr %s1561, 8
        %s1563 = scalar_lea.vmem [#allocation13], %s1562
        // Predicated region
        $region97: #{tpu_custom_call.1} parent=71 // pred_check
          %p1564 = pneg %p404
        $region98: #{tpu_custom_call.1} parent=71 // pred_check_branch
          %1566 = sbr.rel (%p1564) target = $region100
        $region99: #{tpu_custom_call.1} parent=71 // pred_region
          %s1568 = ssub.s32 128, 128
          %1569 = vsyncadd %s1560, %s1568
          %s1570 = smul.addr %s40, 128
          %s1571 = scalar_lea.hbm %s13, %s1570
          %s1573 = sshll.u32 %s1563, 4
          %s1574 = int_to_ptr.vmem [resolvable:$true] %s1573
          %1576 = dma.vmem_to_hbm [thread:$0]  %s1574, 128, %s1571, %s1560
        $region100: #{tpu_custom_call.1} parent=71 // pred_fallthru
          _
      $region72: #{tpu_custom_call.1} parent=5 // pred_fallthru
        _
      %p1577 = scmp.le.s32.totalorder 2, %s31
      // Predicated region
      $region101: #{tpu_custom_call.1} parent=5 // pred_check
        %p1578 = pneg %p1577
      $region102: #{tpu_custom_call.1} parent=5 // pred_check_branch
        %1580 = sbr.rel (%p1578) target = $region104
      $region103: #{tpu_custom_call.1} parent=5 // pred_region
        %s1581 = ssub.s32 %s31, 2
        // Predicated region
        $region105: #{tpu_custom_call.1} parent=103 // pred_check
          %p1582 = pneg %p410
        $region106: #{tpu_custom_call.1} parent=103 // pred_check_branch
          %1584 = sbr.rel (%p1582) target = $region108
        $region107: #{tpu_custom_call.1} parent=103 // pred_region
          %s1585 = sand.u32 %s395, 1
          %s1586 = scalar_lea.sflag [#allocation6], %s1585
          %s1587 = sand.u32 %s395, 1
          %s1588 = smul.addr %s1587, 8
          %s1589 = scalar_lea.vmem [#allocation13], %s1588
          %1590 = dma.done %s1586, 128
        $region108: #{tpu_custom_call.1} parent=103 // pred_fallthru
          _
      $region104: #{tpu_custom_call.1} parent=5 // pred_fallthru
        _
    $region6: #{tpu_custom_call.1} parent=1 // loop_footer
      %s35 = sadd.s32 1, %s31
    $region7: #{tpu_custom_call.1} parent=1 // loop_footer_branch
      %30 = sbr.rel target = $region3
    $region8: #{tpu_custom_call.1} parent=1 // loop_exit
      _
    %1591 = vsyncpa [#allocation5], 1
    %s1592 = scalar_lea.sflag [#allocation5], 1
    %1593 = vsyncpa %s1592, 1
    %1594 = vsyncpa [#allocation8], 1
    %s1595 = scalar_lea.sflag [#allocation8], 1
    %1596 = vsyncpa %s1595, 1
    %1597 = vsyncpa [#allocation11], 1
    %s1598 = scalar_lea.sflag [#allocation11], 1
    %1599 = vsyncpa %s1598, 1
    %1600 = vsyncpa [#allocation6], 1
    %s1601 = scalar_lea.sflag [#allocation6], 1
    %1602 = vsyncpa %s1601, 1

</llo_original>
